<compile_context>
chip_gen: v5e
topology: v5e:2x2
jax: 0.10.0
libtpu: 0.0.40
codegen_flags: <defaults>
</compile_context>

<pallas_src>
import functools

import jax
import jax.numpy as jnp
import numpy as np
from jax.experimental import pallas as pl
from jax.experimental.pallas import tpu as pltpu


# The 9 distinct (dh, dw) input shifts needed by the k=4 / stride-2 deconv.
_SHIFTS = tuple((dh, dw) for dh in (-1, 0, 1) for dw in (-1, 0, 1))
# ConvTranspose2d(k=4, s=2, p=1): output pixel (2i+r, 2j+s) gathers kernel taps
# (kh, kw) with (kh, dh) in _TAPS[r] and (kw, dw) in _TAPS[s], reading the
# input at (i+dh, j+dw).
_TAPS = {0: ((1, 0), (3, -1)), 1: ((0, 1), (2, 0))}


def _leaky_relu(z):
    return jnp.where(z > 0, z, 0.01 * z)


def _elu(z):
    return jnp.where(z > 0, z, jnp.exp(jnp.minimum(z, 0.0)) - 1.0)


def _block_kernel(x_ref, y_ref, wi_ref, wc_ref, fa_ref, wp_ref, pa_ref,
                  wt_ref, ta_ref, mask_ref, out_ref, *, H, W):
    eps = 1e-5
    HW = H * W
    f32 = jnp.float32
    bf16 = jnp.bfloat16
    Cout = ta_ref.shape[0]

    def inorm_act(z, g, b, act):
        # InstanceNorm2d forward (train mode): one-pass per-channel stats
        # over H*W (f32 accumulators), then affine + activation.
        mu = jnp.mean(z, axis=-1, keepdims=True)
        ex2 = jnp.mean(z * z, axis=-1, keepdims=True)
        var = jnp.maximum(ex2 - mu * mu, 0.0)
        return act(g * (z - mu) * jax.lax.rsqrt(var + eps) + b)

    fa = fa_ref[...]                               # (Cin, 4): g_in|be_in|g_cd|be_cd
    # Front 1x1 convs as two separate MXU dots (no block-diag weight / concat).
    # The conv biases are omitted: a per-channel constant added right before
    # InstanceNorm is exactly cancelled by the mean subtraction.
    a_in = jnp.dot(wi_ref[...], x_ref[0], preferred_element_type=f32)
    a_in = inorm_act(a_in, fa[:, 0:1], fa[:, 1:2], _leaky_relu)
    a_cd = jnp.dot(wc_ref[...], y_ref[0], preferred_element_type=f32)
    a_cd = inorm_act(a_cd, fa[:, 2:3], fa[:, 3:4], _leaky_relu)

    # ---- ProductConditionTransform.output(exp(-(x + y) / 8)) ----------------
    z = jnp.exp(-(a_in + a_cd) / 8.0)              # (Cin, HW) f32
    pa = pa_ref[...]                               # (Cin, 2): g_pr|be_pr
    p = jnp.dot(wp_ref[...], z.astype(bf16), preferred_element_type=f32)
    p = inorm_act(p, pa[:, 0:1], pa[:, 1:2], _elu)  # (Cin, HW) f32

    # ---- 9 deduplicated shifted copies of p via XLU rolls --------------------
    # shifted(dh,dw)[c, i*W+j] = p[c, (i+dh)*W + (j+dw)] if in bounds else 0.
    # Circular roll by -(dh*W+dw) + precomputed 0/1 mask; masking stays in f32
    # (v5e has no bf16 VPU path), each plane is cast to bf16 afterwards so the
    # 9x slab only exists in bf16.
    masks = mask_ref[...]                          # (9, HW) f32 0/1
    planes = []
    for m, (dh, dw) in enumerate(_SHIFTS):
        k = dh * W + dw
        if k == 0:
            rolled = p
        else:
            rolled = pltpu.roll(p, shift=(-k) % HW, axis=1) * masks[m:m + 1, :]
        planes.append(rolled.astype(bf16))
    p9 = jnp.concatenate(planes, axis=0)           # (9*Cin, HW) bf16

    # ---- whole transposed conv as ONE MXU matmul ----------------------------
    # wt_ref is the block-sparse (4*Cout, 9*Cin) weight built in the wrapper;
    # row block sp = 2*r + s holds the taps of output parity (r, s).
    conv = jnp.dot(wt_ref[...], p9, preferred_element_type=f32)  # (4*Cout, HW) f32

    # ---- final InstanceNorm over the full (2H, 2W) output + ELU -------------
    # One-pass grouped stats (sum / sum-of-squares over the 4 sub-pixel planes
    # x HW); normalization folded into the epilogue so no centered (4*Cout, HW)
    # temporary is materialized.
    inv_n = 1.0 / (4.0 * HW)

    def group4(v):                                 # (4*Cout, 1) -> (Cout, 1)
        return v[:Cout] + v[Cout:2 * Cout] + v[2 * Cout:3 * Cout] + v[3 * Cout:]

    mu = group4(jnp.sum(conv, axis=-1, keepdims=True)) * inv_n
    ex2 = group4(jnp.sum(conv * conv, axis=-1, keepdims=True)) * inv_n
    rstd = jax.lax.rsqrt(jnp.maximum(ex2 - mu * mu, 0.0) + eps)
    ta = ta_ref[...]                               # (Cout, 2): g_t|be_t
    scale = ta[:, 0:1] * rstd                      # gamma / std
    shift = ta[:, 1:2] - scale * mu                # beta - gamma*mu/std
    scale_b = jnp.concatenate([scale] * 4, axis=0)  # (4*Cout, 1)
    shift_b = jnp.concatenate([shift] * 4, axis=0)
    out_ref[0] = _elu(scale_b * conv + shift_b).astype(out_ref.dtype)


def product_upsampling_conv_block(x, y, params):
    """x: (N, Cin, H, W), y: (N, Cskip, H, W) -> (N, Cout, 2H, 2W) float32."""
    N, Cin, H, W = x.shape
    Cskip = y.shape[1]
    HW = H * W
    wt = params["wt"]                              # (Cin, Cout, 4, 4) PyTorch layout
    Cout = wt.shape[1]
    f32, bf16 = jnp.float32, jnp.bfloat16

    # Streaming operands DMA'd in bf16 (they only feed bf16 MXU matmuls).
    xr = x.reshape(N, Cin, HW).astype(bf16)
    yr = y.reshape(N, Cskip, HW).astype(bf16)

    # Packed per-channel affines. Conv biases (b_in/b_cd/b_pr) are not passed:
    # they are exactly cancelled by the following InstanceNorm mean subtraction.
    front_aff = jnp.stack([params["g_in"], params["be_in"],
                           params["g_cd"], params["be_cd"]], axis=1).astype(f32)
    pr_aff = jnp.stack([params["g_pr"], params["be_pr"]], axis=1).astype(f32)
    t_aff = jnp.stack([params["g_t"], params["be_t"]], axis=1).astype(f32)

    # Block-sparse fused transposed-conv weight: (4*Cout, 9*Cin).
    wt_t = jnp.transpose(wt.astype(f32), (2, 3, 1, 0))   # (4, 4, Cout, Cin)
    wt_big = jnp.zeros((4 * Cout, 9 * Cin), f32)
    for r in (0, 1):
        for s in (0, 1):
            sp = 2 * r + s
            for kh, dh in _TAPS[r]:
                for kw, dw in _TAPS[s]:
                    m = _SHIFTS.index((dh, dw))
                    wt_big = wt_big.at[sp * Cout:(sp + 1) * Cout,
                                       m * Cin:(m + 1) * Cin].set(wt_t[kh, kw])

    # Precomputed 0/1 boundary masks for the 9 (dh, dw) shifts.
    t = jnp.arange(HW, dtype=jnp.int32)
    row, col = t // W, t % W
    masks = jnp.stack(
        [((row + dh >= 0) & (row + dh < H) & (col + dw >= 0) & (col + dw < W))
         .astype(f32) for dh, dw in _SHIFTS], axis=0)    # (9, HW)

    args = (xr, yr,
            params["w_in"].astype(bf16), params["w_cd"].astype(bf16), front_aff,
            params["w_pr"].astype(bf16), pr_aff,
            wt_big.astype(bf16), t_aff, masks)

    def full_spec(a):
        nd = a.ndim
        return pl.BlockSpec(a.shape, lambda n, _nd=nd: (0,) * _nd)

    in_specs = [
        pl.BlockSpec((1, Cin, HW), lambda n: (n, 0, 0)),
        pl.BlockSpec((1, Cskip, HW), lambda n: (n, 0, 0)),
    ] + [full_spec(a) for a in args[2:]]

    out_specs = pl.BlockSpec((1, 4 * Cout, HW), lambda n: (n, 0, 0))

    kern = functools.partial(_block_kernel, H=H, W=W)
    # TODO(synk): for very large H*W add an HW row-block grid axis (1-row halo
    # for the shifts + two-pass final-norm accumulation in scratch) and a
    # second "parallel" axis so both v7x TensorCores have work when N == 1.
    out2 = pl.pallas_call(
        kern,
        out_shape=jax.ShapeDtypeStruct((N, 4 * Cout, HW), jnp.float32),
        grid_spec=pltpu.PrefetchScalarGridSpec(
            num_scalar_prefetch=0,
            grid=(N,),
            in_specs=in_specs,
            out_specs=out_specs,
        ),
        compiler_params=pltpu.CompilerParams(
            dimension_semantics=("parallel",),
            vmem_limit_bytes=32 * 1024 * 1024),
    )(*args)

    # Interleave the 4 sub-pixel planes (row = (2r+s)*Cout + oc) back into
    # (N, Cout, 2H, 2W) -- reshape/transpose glue outside the kernel.
    # TODO(synk): this transpose is an extra HBM round-trip of the f32 output;
    # it could be removed by bitcast-packing the (s=0, s=1) bf16 sub-pixel
    # pairs inside the kernel, at the cost of a bf16 output dtype.
    out = out2.reshape(N, 2, 2, Cout, H, W)          # [n, r, s, oc, i, j]
    out = jnp.transpose(out, (0, 3, 4, 1, 5, 2))     # [n, oc, i, r, j, s]
    return out.reshape(N, Cout, 2 * H, 2 * W)


def _reference(x, y, params):
    """Pure-JAX reference mirroring the PyTorch forward. Matmul operands are
    rounded to bf16 (matching the kernel's precision choice); everything else
    is f32, biases included (they cancel under InstanceNorm)."""
    f32, bf16 = jnp.float32, jnp.bfloat16
    eps = 1e-5

    def rnd(a):
        return a.astype(bf16).astype(f32)

    def inorm(z, g, b):
        mu = jnp.mean(z, axis=(2, 3), keepdims=True)
        var = jnp.mean(jnp.square(z - mu), axis=(2, 3), keepdims=True)
        zh = (z - mu) * jax.lax.rsqrt(var + eps)
        return g[None, :, None, None] * zh + b[None, :, None, None]

    def conv1x1(w, b, z):
        o = jnp.einsum("oi,nihw->nohw", rnd(w), rnd(z))
        return o + b[None, :, None, None]

    a_in = _leaky_relu(inorm(conv1x1(params["w_in"], params["b_in"], x),
                             params["g_in"], params["be_in"]))
    a_cd = _leaky_relu(inorm(conv1x1(params["w_cd"], params["b_cd"], y),
                             params["g_cd"], params["be_cd"]))
    z = jnp.exp(-(a_in + a_cd) / 8.0)
    p = _elu(inorm(conv1x1(params["w_pr"], params["b_pr"], z),
                   params["g_pr"], params["be_pr"]))

    # ConvTranspose2d(k=4, s=2, p=1, bias=False) as a dilated direct conv.
    w_eq = jnp.flip(rnd(params["wt"]), axis=(2, 3)).transpose(1, 0, 2, 3)
    conv = jax.lax.conv_general_dilated(
        rnd(p), w_eq, window_strides=(1, 1), padding=((2, 2), (2, 2)),
        lhs_dilation=(2, 2), dimension_numbers=("NCHW", "OIHW", "NCHW"))
    return _elu(inorm(conv, params["g_t"], params["be_t"]))


if __name__ == "__main__":
    N, Cin, Cout, Cskip, H, W = 2, 4, 8, 6, 16, 16
    key = jax.random.PRNGKey(0)
    ks = jax.random.split(key, 10)

    def nrm(k, shape, scale=0.2):
        return scale * jax.random.normal(k, shape, jnp.float32)

    params = dict(
        # ProductConditionTransform.input: Conv2d(Cin->Cin, 1x1) + InstanceNorm affine
        w_in=nrm(ks[0], (Cin, Cin)), b_in=nrm(ks[1], (Cin,)),
        g_in=jnp.ones((Cin,), jnp.float32), be_in=jnp.zeros((Cin,), jnp.float32),
        # ProductConditionTransform.condition: Conv2d(Cskip->Cin, 1x1) + InstanceNorm affine
        w_cd=nrm(ks[2], (Cin, Cskip)), b_cd=nrm(ks[3], (Cin,)),
        g_cd=jnp.ones((Cin,), jnp.float32), be_cd=jnp.zeros((Cin,), jnp.float32),
        # ProductConditionTransform.output: Conv2d(Cin->Cin, 1x1) + InstanceNorm affine
        w_pr=nrm(ks[4], (Cin, Cin)), b_pr=nrm(ks[5], (Cin,)),
        g_pr=jnp.ones((Cin,), jnp.float32), be_pr=jnp.zeros((Cin,), jnp.float32),
        # model: ConvTranspose2d(Cin->Cout, k=4, s=2, p=1, bias=False) + InstanceNorm affine
        wt=nrm(ks[6], (Cin, Cout, 4, 4)),
        g_t=jnp.ones((Cout,), jnp.float32), be_t=jnp.zeros((Cout,), jnp.float32),
    )

    x = jax.random.normal(ks[7], (N, Cin, H, W), jnp.float32)
    y = jax.random.normal(ks[8], (N, Cskip, H, W), jnp.float32)

    fwd = jax.jit(product_upsampling_conv_block)
    out = jax.block_until_ready(fwd(x, y, params))
    assert out.shape == (N, Cout, 2 * H, 2 * W), out.shape
    assert bool(jnp.all(jnp.isfinite(out)))

    # Validate against a pure-JAX reference of the PyTorch forward (loose
    # tolerance covers bf16-rounding boundary flips; structural errors are O(1)).
    ref = jax.block_until_ready(jax.jit(_reference)(x, y, params))
    np.testing.assert_allclose(np.asarray(out), np.asarray(ref),
                               rtol=5e-2, atol=5e-2)
    print("KERNEL_OK")
</pallas_src>

<mosaic_0001>
module attributes {stable_mosaic.version = 11 : i64} {
  func.func @_block_kernel(%arg0: i32, %arg1: memref<1x4x256xbf16, #tpu.memory_space<vmem>>, %arg2: memref<1x6x256xbf16, #tpu.memory_space<vmem>>, %arg3: memref<4x4xbf16, #tpu.memory_space<vmem>>, %arg4: memref<4x6xbf16, #tpu.memory_space<vmem>>, %arg5: memref<4x4xf32, #tpu.memory_space<vmem>>, %arg6: memref<4x4xbf16, #tpu.memory_space<vmem>>, %arg7: memref<4x2xf32, #tpu.memory_space<vmem>>, %arg8: memref<32x36xbf16, #tpu.memory_space<vmem>>, %arg9: memref<8x2xf32, #tpu.memory_space<vmem>>, %arg10: memref<9x256xf32, #tpu.memory_space<vmem>>, %arg11: memref<1x32x256xf32, #tpu.memory_space<vmem>>) attributes {dimension_semantics = [#tpu.dimension_semantics<parallel>], iteration_bounds = array<i64: 2>, scalar_prefetch = 0 : i64, scratch_operands = 0 : i64, tpu.core_type = #tpu.core_type<tc>, window_params = [{transform_indices = @transform_0, window_bounds = array<i64: 1, 4, 256>}, {transform_indices = @transform_1, window_bounds = array<i64: 1, 6, 256>}, {pipeline_mode = #tpu.pipeline_mode<synchronous>, transform_indices = @transform_2, window_bounds = array<i64: 4, 4>}, {pipeline_mode = #tpu.pipeline_mode<synchronous>, transform_indices = @transform_3, window_bounds = array<i64: 4, 6>}, {pipeline_mode = #tpu.pipeline_mode<synchronous>, transform_indices = @transform_4, window_bounds = array<i64: 4, 4>}, {pipeline_mode = #tpu.pipeline_mode<synchronous>, transform_indices = @transform_5, window_bounds = array<i64: 4, 4>}, {pipeline_mode = #tpu.pipeline_mode<synchronous>, transform_indices = @transform_6, window_bounds = array<i64: 4, 2>}, {pipeline_mode = #tpu.pipeline_mode<synchronous>, transform_indices = @transform_7, window_bounds = array<i64: 32, 36>}, {pipeline_mode = #tpu.pipeline_mode<synchronous>, transform_indices = @transform_8, window_bounds = array<i64: 8, 2>}, {pipeline_mode = #tpu.pipeline_mode<synchronous>, transform_indices = @transform_9, window_bounds = array<i64: 9, 256>}, {transform_indices = @transform_10, window_bounds = array<i64: 1, 32, 256>}]} {
    %c0 = arith.constant 0 : index
    %c0_0 = arith.constant 0 : index
    %0 = vector.load %arg5[%c0, %c0_0] : memref<4x4xf32, #tpu.memory_space<vmem>>, vector<4x4xf32>
    %c0_1 = arith.constant 0 : index
    %c0_2 = arith.constant 0 : index
    %1 = vector.load %arg3[%c0_1, %c0_2] : memref<4x4xbf16, #tpu.memory_space<vmem>>, vector<4x4xbf16>
    %c0_3 = arith.constant 0 : index
    %c0_4 = arith.constant 0 : index
    %c0_5 = arith.constant 0 : index
    %2 = vector.load %arg1[%c0_3, %c0_4, %c0_5] : memref<1x4x256xbf16, #tpu.memory_space<vmem>>, vector<1x4x256xbf16>
    %3 = vector.shape_cast %2 : vector<1x4x256xbf16> to vector<4x256xbf16>
    %cst = arith.constant dense<0.000000e+00> : vector<4x256xf32>
    %4 = tpu.matmul %1, %3, %cst {dimension_numbers = #tpu.dot_dimension_numbers<[1], [0], [0], [1], [0, 0, 1, 1], [], []>} : vector<4x4xbf16>, vector<4x256xbf16>, vector<4x256xf32> -> vector<4x256xf32>
    %5 = vector.extract_strided_slice %0 {offsets = [0, 0], sizes = [4, 1], strides = [1, 1]} : vector<4x4xf32> to vector<4x1xf32>
    %6 = vector.extract_strided_slice %0 {offsets = [0, 1], sizes = [4, 1], strides = [1, 1]} : vector<4x4xf32> to vector<4x1xf32>
    %cst_6 = arith.constant dense<0.000000e+00> : vector<4xf32>
    %7 = vector.multi_reduction <add>, %4, %cst_6 [1] : vector<4x256xf32> to vector<4xf32>
    %8 = vector.shape_cast %7 : vector<4xf32> to vector<4x1xf32>
    %cst_7 = arith.constant 2.560000e+02 : f32
    %9 = vector.broadcast %cst_7 : f32 to vector<4x1xf32>
    %10 = arith.divf %8, %9 : vector<4x1xf32>
    %11 = arith.mulf %4, %4 : vector<4x256xf32>
    %cst_8 = arith.constant dense<0.000000e+00> : vector<4xf32>
    %12 = vector.multi_reduction <add>, %11, %cst_8 [1] : vector<4x256xf32> to vector<4xf32>
    %13 = vector.shape_cast %12 : vector<4xf32> to vector<4x1xf32>
    %cst_9 = arith.constant 2.560000e+02 : f32
    %14 = vector.broadcast %cst_9 : f32 to vector<4x1xf32>
    %15 = arith.divf %13, %14 : vector<4x1xf32>
    %16 = arith.mulf %10, %10 : vector<4x1xf32>
    %17 = arith.subf %15, %16 : vector<4x1xf32>
    %cst_10 = arith.constant 0.000000e+00 : f32
    %18 = vector.broadcast %cst_10 : f32 to vector<4x1xf32>
    %19 = arith.maximumf %17, %18 : vector<4x1xf32>
    %20 = vector.broadcast %10 : vector<4x1xf32> to vector<4x256xf32>
    %21 = arith.subf %4, %20 : vector<4x256xf32>
    %22 = vector.broadcast %5 : vector<4x1xf32> to vector<4x256xf32>
    %23 = arith.mulf %22, %21 : vector<4x256xf32>
    %cst_11 = arith.constant 9.99999974E-6 : f32
    %24 = vector.broadcast %cst_11 : f32 to vector<4x1xf32>
    %25 = arith.addf %19, %24 : vector<4x1xf32>
    %26 = math.rsqrt %25 : vector<4x1xf32>
    %27 = vector.broadcast %26 : vector<4x1xf32> to vector<4x256xf32>
    %28 = arith.mulf %23, %27 : vector<4x256xf32>
    %29 = vector.broadcast %6 : vector<4x1xf32> to vector<4x256xf32>
    %30 = arith.addf %28, %29 : vector<4x256xf32>
    %cst_12 = arith.constant 0.000000e+00 : f32
    %31 = vector.broadcast %cst_12 : f32 to vector<4x256xf32>
    %32 = arith.cmpf ogt, %30, %31 : vector<4x256xf32>
    %cst_13 = arith.constant 0.00999999977 : f32
    %33 = vector.broadcast %cst_13 : f32 to vector<4x256xf32>
    %34 = arith.mulf %33, %30 : vector<4x256xf32>
    %35 = arith.select %32, %30, %34 : vector<4x256xi1>, vector<4x256xf32>
    %c0_14 = arith.constant 0 : index
    %c0_15 = arith.constant 0 : index
    %36 = vector.load %arg4[%c0_14, %c0_15] : memref<4x6xbf16, #tpu.memory_space<vmem>>, vector<4x6xbf16>
    %c0_16 = arith.constant 0 : index
    %c0_17 = arith.constant 0 : index
    %c0_18 = arith.constant 0 : index
    %37 = vector.load %arg2[%c0_16, %c0_17, %c0_18] : memref<1x6x256xbf16, #tpu.memory_space<vmem>>, vector<1x6x256xbf16>
    %38 = vector.shape_cast %37 : vector<1x6x256xbf16> to vector<6x256xbf16>
    %cst_19 = arith.constant dense<0.000000e+00> : vector<4x256xf32>
    %39 = tpu.matmul %36, %38, %cst_19 {dimension_numbers = #tpu.dot_dimension_numbers<[1], [0], [0], [1], [0, 0, 1, 1], [], []>} : vector<4x6xbf16>, vector<6x256xbf16>, vector<4x256xf32> -> vector<4x256xf32>
    %40 = vector.extract_strided_slice %0 {offsets = [0, 2], sizes = [4, 1], strides = [1, 1]} : vector<4x4xf32> to vector<4x1xf32>
    %41 = vector.extract_strided_slice %0 {offsets = [0, 3], sizes = [4, 1], strides = [1, 1]} : vector<4x4xf32> to vector<4x1xf32>
    %cst_20 = arith.constant dense<0.000000e+00> : vector<4xf32>
    %42 = vector.multi_reduction <add>, %39, %cst_20 [1] : vector<4x256xf32> to vector<4xf32>
    %43 = vector.shape_cast %42 : vector<4xf32> to vector<4x1xf32>
    %cst_21 = arith.constant 2.560000e+02 : f32
    %44 = vector.broadcast %cst_21 : f32 to vector<4x1xf32>
    %45 = arith.divf %43, %44 : vector<4x1xf32>
    %46 = arith.mulf %39, %39 : vector<4x256xf32>
    %cst_22 = arith.constant dense<0.000000e+00> : vector<4xf32>
    %47 = vector.multi_reduction <add>, %46, %cst_22 [1] : vector<4x256xf32> to vector<4xf32>
    %48 = vector.shape_cast %47 : vector<4xf32> to vector<4x1xf32>
    %cst_23 = arith.constant 2.560000e+02 : f32
    %49 = vector.broadcast %cst_23 : f32 to vector<4x1xf32>
    %50 = arith.divf %48, %49 : vector<4x1xf32>
    %51 = arith.mulf %45, %45 : vector<4x1xf32>
    %52 = arith.subf %50, %51 : vector<4x1xf32>
    %cst_24 = arith.constant 0.000000e+00 : f32
    %53 = vector.broadcast %cst_24 : f32 to vector<4x1xf32>
    %54 = arith.maximumf %52, %53 : vector<4x1xf32>
    %55 = vector.broadcast %45 : vector<4x1xf32> to vector<4x256xf32>
    %56 = arith.subf %39, %55 : vector<4x256xf32>
    %57 = vector.broadcast %40 : vector<4x1xf32> to vector<4x256xf32>
    %58 = arith.mulf %57, %56 : vector<4x256xf32>
    %cst_25 = arith.constant 9.99999974E-6 : f32
    %59 = vector.broadcast %cst_25 : f32 to vector<4x1xf32>
    %60 = arith.addf %54, %59 : vector<4x1xf32>
    %61 = math.rsqrt %60 : vector<4x1xf32>
    %62 = vector.broadcast %61 : vector<4x1xf32> to vector<4x256xf32>
    %63 = arith.mulf %58, %62 : vector<4x256xf32>
    %64 = vector.broadcast %41 : vector<4x1xf32> to vector<4x256xf32>
    %65 = arith.addf %63, %64 : vector<4x256xf32>
    %cst_26 = arith.constant 0.000000e+00 : f32
    %66 = vector.broadcast %cst_26 : f32 to vector<4x256xf32>
    %67 = arith.cmpf ogt, %65, %66 : vector<4x256xf32>
    %cst_27 = arith.constant 0.00999999977 : f32
    %68 = vector.broadcast %cst_27 : f32 to vector<4x256xf32>
    %69 = arith.mulf %68, %65 : vector<4x256xf32>
    %70 = arith.select %67, %65, %69 : vector<4x256xi1>, vector<4x256xf32>
    %71 = arith.addf %35, %70 : vector<4x256xf32>
    %cst_28 = arith.constant 0.000000e+00 : f32
    %72 = vector.broadcast %cst_28 : f32 to vector<4x256xf32>
    %73 = arith.subf %72, %71 : vector<4x256xf32>
    %cst_29 = arith.constant 8.000000e+00 : f32
    %74 = vector.broadcast %cst_29 : f32 to vector<4x256xf32>
    %75 = arith.divf %73, %74 : vector<4x256xf32>
    %76 = math.exp %75 : vector<4x256xf32>
    %c0_30 = arith.constant 0 : index
    %c0_31 = arith.constant 0 : index
    %77 = vector.load %arg7[%c0_30, %c0_31] : memref<4x2xf32, #tpu.memory_space<vmem>>, vector<4x2xf32>
    %c0_32 = arith.constant 0 : index
    %c0_33 = arith.constant 0 : index
    %78 = vector.load %arg6[%c0_32, %c0_33] : memref<4x4xbf16, #tpu.memory_space<vmem>>, vector<4x4xbf16>
    %79 = arith.truncf %76 : vector<4x256xf32> to vector<4x256xbf16>
    %cst_34 = arith.constant dense<0.000000e+00> : vector<4x256xf32>
    %80 = tpu.matmul %78, %79, %cst_34 {dimension_numbers = #tpu.dot_dimension_numbers<[1], [0], [0], [1], [0, 0, 1, 1], [], []>} : vector<4x4xbf16>, vector<4x256xbf16>, vector<4x256xf32> -> vector<4x256xf32>
    %81 = vector.extract_strided_slice %77 {offsets = [0, 0], sizes = [4, 1], strides = [1, 1]} : vector<4x2xf32> to vector<4x1xf32>
    %82 = vector.extract_strided_slice %77 {offsets = [0, 1], sizes = [4, 1], strides = [1, 1]} : vector<4x2xf32> to vector<4x1xf32>
    %cst_35 = arith.constant dense<0.000000e+00> : vector<4xf32>
    %83 = vector.multi_reduction <add>, %80, %cst_35 [1] : vector<4x256xf32> to vector<4xf32>
    %84 = vector.shape_cast %83 : vector<4xf32> to vector<4x1xf32>
    %cst_36 = arith.constant 2.560000e+02 : f32
    %85 = vector.broadcast %cst_36 : f32 to vector<4x1xf32>
    %86 = arith.divf %84, %85 : vector<4x1xf32>
    %87 = arith.mulf %80, %80 : vector<4x256xf32>
    %cst_37 = arith.constant dense<0.000000e+00> : vector<4xf32>
    %88 = vector.multi_reduction <add>, %87, %cst_37 [1] : vector<4x256xf32> to vector<4xf32>
    %89 = vector.shape_cast %88 : vector<4xf32> to vector<4x1xf32>
    %cst_38 = arith.constant 2.560000e+02 : f32
    %90 = vector.broadcast %cst_38 : f32 to vector<4x1xf32>
    %91 = arith.divf %89, %90 : vector<4x1xf32>
    %92 = arith.mulf %86, %86 : vector<4x1xf32>
    %93 = arith.subf %91, %92 : vector<4x1xf32>
    %cst_39 = arith.constant 0.000000e+00 : f32
    %94 = vector.broadcast %cst_39 : f32 to vector<4x1xf32>
    %95 = arith.maximumf %93, %94 : vector<4x1xf32>
    %96 = vector.broadcast %86 : vector<4x1xf32> to vector<4x256xf32>
    %97 = arith.subf %80, %96 : vector<4x256xf32>
    %98 = vector.broadcast %81 : vector<4x1xf32> to vector<4x256xf32>
    %99 = arith.mulf %98, %97 : vector<4x256xf32>
    %cst_40 = arith.constant 9.99999974E-6 : f32
    %100 = vector.broadcast %cst_40 : f32 to vector<4x1xf32>
    %101 = arith.addf %95, %100 : vector<4x1xf32>
    %102 = math.rsqrt %101 : vector<4x1xf32>
    %103 = vector.broadcast %102 : vector<4x1xf32> to vector<4x256xf32>
    %104 = arith.mulf %99, %103 : vector<4x256xf32>
    %105 = vector.broadcast %82 : vector<4x1xf32> to vector<4x256xf32>
    %106 = arith.addf %104, %105 : vector<4x256xf32>
    %cst_41 = arith.constant 0.000000e+00 : f32
    %107 = vector.broadcast %cst_41 : f32 to vector<4x256xf32>
    %108 = arith.cmpf ogt, %106, %107 : vector<4x256xf32>
    %cst_42 = arith.constant 0.000000e+00 : f32
    %109 = vector.broadcast %cst_42 : f32 to vector<4x256xf32>
    %110 = arith.minimumf %106, %109 : vector<4x256xf32>
    %111 = math.exp %110 : vector<4x256xf32>
    %cst_43 = arith.constant 1.000000e+00 : f32
    %112 = vector.broadcast %cst_43 : f32 to vector<4x256xf32>
    %113 = arith.subf %111, %112 : vector<4x256xf32>
    %114 = arith.select %108, %106, %113 : vector<4x256xi1>, vector<4x256xf32>
    %c0_44 = arith.constant 0 : index
    %c0_45 = arith.constant 0 : index
    %115 = vector.load %arg10[%c0_44, %c0_45] : memref<9x256xf32, #tpu.memory_space<vmem>>, vector<9x256xf32>
    %c17_i32 = arith.constant 17 : i32
    %116 = tpu.dynamic_rotate %114 by %c17_i32 dim 1 : vector<4x256xf32>, i32 -> vector<4x256xf32>
    %117 = vector.extract_strided_slice %115 {offsets = [0, 0], sizes = [1, 256], strides = [1, 1]} : vector<9x256xf32> to vector<1x256xf32>
    %118 = vector.broadcast %117 : vector<1x256xf32> to vector<4x256xf32>
    %119 = arith.mulf %116, %118 : vector<4x256xf32>
    %120 = arith.truncf %119 : vector<4x256xf32> to vector<4x256xbf16>
    %c16_i32 = arith.constant 16 : i32
    %121 = tpu.dynamic_rotate %114 by %c16_i32 dim 1 : vector<4x256xf32>, i32 -> vector<4x256xf32>
    %122 = vector.extract_strided_slice %115 {offsets = [1, 0], sizes = [1, 256], strides = [1, 1]} : vector<9x256xf32> to vector<1x256xf32>
    %123 = vector.broadcast %122 : vector<1x256xf32> to vector<4x256xf32>
    %124 = arith.mulf %121, %123 : vector<4x256xf32>
    %125 = arith.truncf %124 : vector<4x256xf32> to vector<4x256xbf16>
    %c15_i32 = arith.constant 15 : i32
    %126 = tpu.dynamic_rotate %114 by %c15_i32 dim 1 : vector<4x256xf32>, i32 -> vector<4x256xf32>
    %127 = vector.extract_strided_slice %115 {offsets = [2, 0], sizes = [1, 256], strides = [1, 1]} : vector<9x256xf32> to vector<1x256xf32>
    %128 = vector.broadcast %127 : vector<1x256xf32> to vector<4x256xf32>
    %129 = arith.mulf %126, %128 : vector<4x256xf32>
    %130 = arith.truncf %129 : vector<4x256xf32> to vector<4x256xbf16>
    %c1_i32 = arith.constant 1 : i32
    %131 = tpu.dynamic_rotate %114 by %c1_i32 dim 1 : vector<4x256xf32>, i32 -> vector<4x256xf32>
    %132 = vector.extract_strided_slice %115 {offsets = [3, 0], sizes = [1, 256], strides = [1, 1]} : vector<9x256xf32> to vector<1x256xf32>
    %133 = vector.broadcast %132 : vector<1x256xf32> to vector<4x256xf32>
    %134 = arith.mulf %131, %133 : vector<4x256xf32>
    %135 = arith.truncf %134 : vector<4x256xf32> to vector<4x256xbf16>
    %136 = arith.truncf %114 : vector<4x256xf32> to vector<4x256xbf16>
    %c255_i32 = arith.constant 255 : i32
    %137 = tpu.dynamic_rotate %114 by %c255_i32 dim 1 : vector<4x256xf32>, i32 -> vector<4x256xf32>
    %138 = vector.extract_strided_slice %115 {offsets = [5, 0], sizes = [1, 256], strides = [1, 1]} : vector<9x256xf32> to vector<1x256xf32>
    %139 = vector.broadcast %138 : vector<1x256xf32> to vector<4x256xf32>
    %140 = arith.mulf %137, %139 : vector<4x256xf32>
    %141 = arith.truncf %140 : vector<4x256xf32> to vector<4x256xbf16>
    %c241_i32 = arith.constant 241 : i32
    %142 = tpu.dynamic_rotate %114 by %c241_i32 dim 1 : vector<4x256xf32>, i32 -> vector<4x256xf32>
    %143 = vector.extract_strided_slice %115 {offsets = [6, 0], sizes = [1, 256], strides = [1, 1]} : vector<9x256xf32> to vector<1x256xf32>
    %144 = vector.broadcast %143 : vector<1x256xf32> to vector<4x256xf32>
    %145 = arith.mulf %142, %144 : vector<4x256xf32>
    %146 = arith.truncf %145 : vector<4x256xf32> to vector<4x256xbf16>
    %c240_i32 = arith.constant 240 : i32
    %147 = tpu.dynamic_rotate %114 by %c240_i32 dim 1 : vector<4x256xf32>, i32 -> vector<4x256xf32>
    %148 = vector.extract_strided_slice %115 {offsets = [7, 0], sizes = [1, 256], strides = [1, 1]} : vector<9x256xf32> to vector<1x256xf32>
    %149 = vector.broadcast %148 : vector<1x256xf32> to vector<4x256xf32>
    %150 = arith.mulf %147, %149 : vector<4x256xf32>
    %151 = arith.truncf %150 : vector<4x256xf32> to vector<4x256xbf16>
    %c239_i32 = arith.constant 239 : i32
    %152 = tpu.dynamic_rotate %114 by %c239_i32 dim 1 : vector<4x256xf32>, i32 -> vector<4x256xf32>
    %153 = vector.extract_strided_slice %115 {offsets = [8, 0], sizes = [1, 256], strides = [1, 1]} : vector<9x256xf32> to vector<1x256xf32>
    %154 = vector.broadcast %153 : vector<1x256xf32> to vector<4x256xf32>
    %155 = arith.mulf %152, %154 : vector<4x256xf32>
    %156 = arith.truncf %155 : vector<4x256xf32> to vector<4x256xbf16>
    %157 = tpu.concatenate %120, %125, %130, %135, %136, %141, %146, %151, %156 in 0 : vector<4x256xbf16>, vector<4x256xbf16>, vector<4x256xbf16>, vector<4x256xbf16>, vector<4x256xbf16>, vector<4x256xbf16>, vector<4x256xbf16>, vector<4x256xbf16>, vector<4x256xbf16> -> vector<36x256xbf16>
    %c0_46 = arith.constant 0 : index
    %c0_47 = arith.constant 0 : index
    %158 = vector.load %arg8[%c0_46, %c0_47] : memref<32x36xbf16, #tpu.memory_space<vmem>>, vector<32x36xbf16>
    %cst_48 = arith.constant dense<0.000000e+00> : vector<32x256xf32>
    %159 = tpu.matmul %158, %157, %cst_48 {dimension_numbers = #tpu.dot_dimension_numbers<[1], [0], [0], [1], [0, 0, 1, 1], [], []>} : vector<32x36xbf16>, vector<36x256xbf16>, vector<32x256xf32> -> vector<32x256xf32>
    %cst_49 = arith.constant dense<0.000000e+00> : vector<32xf32>
    %160 = vector.multi_reduction <add>, %159, %cst_49 [1] : vector<32x256xf32> to vector<32xf32>
    %161 = vector.shape_cast %160 : vector<32xf32> to vector<32x1xf32>
    %162 = vector.extract_strided_slice %161 {offsets = [0, 0], sizes = [8, 1], strides = [1, 1]} : vector<32x1xf32> to vector<8x1xf32>
    %163 = vector.extract_strided_slice %161 {offsets = [8, 0], sizes = [8, 1], strides = [1, 1]} : vector<32x1xf32> to vector<8x1xf32>
    %164 = arith.addf %162, %163 : vector<8x1xf32>
    %165 = vector.extract_strided_slice %161 {offsets = [16, 0], sizes = [8, 1], strides = [1, 1]} : vector<32x1xf32> to vector<8x1xf32>
    %166 = arith.addf %164, %165 : vector<8x1xf32>
    %167 = vector.extract_strided_slice %161 {offsets = [24, 0], sizes = [8, 1], strides = [1, 1]} : vector<32x1xf32> to vector<8x1xf32>
    %168 = arith.addf %166, %167 : vector<8x1xf32>
    %cst_50 = arith.constant 9.765625E-4 : f32
    %169 = vector.broadcast %cst_50 : f32 to vector<8x1xf32>
    %170 = arith.mulf %168, %169 : vector<8x1xf32>
    %171 = arith.mulf %159, %159 : vector<32x256xf32>
    %cst_51 = arith.constant dense<0.000000e+00> : vector<32xf32>
    %172 = vector.multi_reduction <add>, %171, %cst_51 [1] : vector<32x256xf32> to vector<32xf32>
    %173 = vector.shape_cast %172 : vector<32xf32> to vector<32x1xf32>
    %174 = vector.extract_strided_slice %173 {offsets = [0, 0], sizes = [8, 1], strides = [1, 1]} : vector<32x1xf32> to vector<8x1xf32>
    %175 = vector.extract_strided_slice %173 {offsets = [8, 0], sizes = [8, 1], strides = [1, 1]} : vector<32x1xf32> to vector<8x1xf32>
    %176 = arith.addf %174, %175 : vector<8x1xf32>
    %177 = vector.extract_strided_slice %173 {offsets = [16, 0], sizes = [8, 1], strides = [1, 1]} : vector<32x1xf32> to vector<8x1xf32>
    %178 = arith.addf %176, %177 : vector<8x1xf32>
    %179 = vector.extract_strided_slice %173 {offsets = [24, 0], sizes = [8, 1], strides = [1, 1]} : vector<32x1xf32> to vector<8x1xf32>
    %180 = arith.addf %178, %179 : vector<8x1xf32>
    %cst_52 = arith.constant 9.765625E-4 : f32
    %181 = vector.broadcast %cst_52 : f32 to vector<8x1xf32>
    %182 = arith.mulf %180, %181 : vector<8x1xf32>
    %183 = arith.mulf %170, %170 : vector<8x1xf32>
    %184 = arith.subf %182, %183 : vector<8x1xf32>
    %cst_53 = arith.constant 0.000000e+00 : f32
    %185 = vector.broadcast %cst_53 : f32 to vector<8x1xf32>
    %186 = arith.maximumf %184, %185 : vector<8x1xf32>
    %cst_54 = arith.constant 9.99999974E-6 : f32
    %187 = vector.broadcast %cst_54 : f32 to vector<8x1xf32>
    %188 = arith.addf %186, %187 : vector<8x1xf32>
    %189 = math.rsqrt %188 : vector<8x1xf32>
    %c0_55 = arith.constant 0 : index
    %c0_56 = arith.constant 0 : index
    %190 = vector.load %arg9[%c0_55, %c0_56] : memref<8x2xf32, #tpu.memory_space<vmem>>, vector<8x2xf32>
    %191 = vector.extract_strided_slice %190 {offsets = [0, 0], sizes = [8, 1], strides = [1, 1]} : vector<8x2xf32> to vector<8x1xf32>
    %192 = arith.mulf %191, %189 : vector<8x1xf32>
    %193 = vector.extract_strided_slice %190 {offsets = [0, 1], sizes = [8, 1], strides = [1, 1]} : vector<8x2xf32> to vector<8x1xf32>
    %194 = arith.mulf %192, %170 : vector<8x1xf32>
    %195 = arith.subf %193, %194 : vector<8x1xf32>
    %196 = tpu.concatenate %192, %192, %192, %192 in 0 : vector<8x1xf32>, vector<8x1xf32>, vector<8x1xf32>, vector<8x1xf32> -> vector<32x1xf32>
    %197 = tpu.concatenate %195, %195, %195, %195 in 0 : vector<8x1xf32>, vector<8x1xf32>, vector<8x1xf32>, vector<8x1xf32> -> vector<32x1xf32>
    %198 = vector.broadcast %196 : vector<32x1xf32> to vector<32x256xf32>
    %199 = arith.mulf %198, %159 : vector<32x256xf32>
    %200 = vector.broadcast %197 : vector<32x1xf32> to vector<32x256xf32>
    %201 = arith.addf %199, %200 : vector<32x256xf32>
    %cst_57 = arith.constant 0.000000e+00 : f32
    %202 = vector.broadcast %cst_57 : f32 to vector<32x256xf32>
    %203 = arith.cmpf ogt, %201, %202 : vector<32x256xf32>
    %cst_58 = arith.constant 0.000000e+00 : f32
    %204 = vector.broadcast %cst_58 : f32 to vector<32x256xf32>
    %205 = arith.minimumf %201, %204 : vector<32x256xf32>
    %206 = math.exp %205 : vector<32x256xf32>
    %cst_59 = arith.constant 1.000000e+00 : f32
    %207 = vector.broadcast %cst_59 : f32 to vector<32x256xf32>
    %208 = arith.subf %206, %207 : vector<32x256xf32>
    %209 = arith.select %203, %201, %208 : vector<32x256xi1>, vector<32x256xf32>
    %c0_60 = arith.constant 0 : index
    %c0_61 = arith.constant 0 : index
    %c0_62 = arith.constant 0 : index
    %210 = vector.load %arg11[%c0_60, %c0_61, %c0_62] : memref<1x32x256xf32, #tpu.memory_space<vmem>>, vector<1x32x256xf32>
    %211 = vector.shape_cast %210 : vector<1x32x256xf32> to vector<32x256xf32>
    %212 = vector.shape_cast %209 : vector<32x256xf32> to vector<1x32x256xf32>
    tpu.vector_store %arg11[%c0_60, %c0_61, %c0_62], %212 {strides = array<i32>} : memref<1x32x256xf32, #tpu.memory_space<vmem>>, vector<1x32x256xf32>,
    return
  }
  func.func @transform_0(%arg0: i32) -> (i32, i32, i32) {
    %c0_i32 = arith.constant 0 : i32
    %c0_i32_0 = arith.constant 0 : i32
    %c0_i32_1 = arith.constant 0 : i32
    return %arg0, %c0_i32, %c0_i32_0 : i32, i32, i32
  }
  func.func @transform_1(%arg0: i32) -> (i32, i32, i32) {
    %c0_i32 = arith.constant 0 : i32
    %c0_i32_0 = arith.constant 0 : i32
    %c0_i32_1 = arith.constant 0 : i32
    return %arg0, %c0_i32, %c0_i32_0 : i32, i32, i32
  }
  func.func @transform_2(%arg0: i32) -> (i32, i32) {
    %c0_i32 = arith.constant 0 : i32
    %c0_i32_0 = arith.constant 0 : i32
    %c0_i32_1 = arith.constant 0 : i32
    return %c0_i32, %c0_i32_0 : i32, i32
  }
  func.func @transform_3(%arg0: i32) -> (i32, i32) {
    %c0_i32 = arith.constant 0 : i32
    %c0_i32_0 = arith.constant 0 : i32
    %c0_i32_1 = arith.constant 0 : i32
    return %c0_i32, %c0_i32_0 : i32, i32
  }
  func.func @transform_4(%arg0: i32) -> (i32, i32) {
    %c0_i32 = arith.constant 0 : i32
    %c0_i32_0 = arith.constant 0 : i32
    %c0_i32_1 = arith.constant 0 : i32
    return %c0_i32, %c0_i32_0 : i32, i32
  }
  func.func @transform_5(%arg0: i32) -> (i32, i32) {
    %c0_i32 = arith.constant 0 : i32
    %c0_i32_0 = arith.constant 0 : i32
    %c0_i32_1 = arith.constant 0 : i32
    return %c0_i32, %c0_i32_0 : i32, i32
  }
  func.func @transform_6(%arg0: i32) -> (i32, i32) {
    %c0_i32 = arith.constant 0 : i32
    %c0_i32_0 = arith.constant 0 : i32
    %c0_i32_1 = arith.constant 0 : i32
    return %c0_i32, %c0_i32_0 : i32, i32
  }
  func.func @transform_7(%arg0: i32) -> (i32, i32) {
    %c0_i32 = arith.constant 0 : i32
    %c0_i32_0 = arith.constant 0 : i32
    %c0_i32_1 = arith.constant 0 : i32
    return %c0_i32, %c0_i32_0 : i32, i32
  }
  func.func @transform_8(%arg0: i32) -> (i32, i32) {
    %c0_i32 = arith.constant 0 : i32
    %c0_i32_0 = arith.constant 0 : i32
    %c0_i32_1 = arith.constant 0 : i32
    return %c0_i32, %c0_i32_0 : i32, i32
  }
  func.func @transform_9(%arg0: i32) -> (i32, i32) {
    %c0_i32 = arith.constant 0 : i32
    %c0_i32_0 = arith.constant 0 : i32
    %c0_i32_1 = arith.constant 0 : i32
    return %c0_i32, %c0_i32_0 : i32, i32
  }
  func.func @transform_10(%arg0: i32) -> (i32, i32, i32) {
    %c0_i32 = arith.constant 0 : i32
    %c0_i32_0 = arith.constant 0 : i32
    %c0_i32_1 = arith.constant 0 : i32
    return %arg0, %c0_i32, %c0_i32_0 : i32, i32, i32
  }
}

</mosaic_0001>

<llo_original>
// kernel: product_upsampling_conv_block.1
$region0: #{product_upsampling_conv_block.1}
  #allocation0 [shape = 'u32[]', space=smem, size = 0x4, offset = 0x4, fixed_abs, tag = 'smem constant byte address 0x4 - core index']
  #allocation1 [shape = 'u32[72,128]{1,0:T(1,128)}', space=vmem, size = 0x9000, scoped, tag = 'internal scratch']
  %s0 = inlined_call_operand.vmem [shape: bf16[2,4,256], index: 0, kind: input, shape index: {}]
  %s1 = inlined_call_operand.vmem [shape: bf16[2,6,256], index: 1, kind: input, shape index: {}]
  %s2 = inlined_call_operand.vmem [shape: bf16[4,4], index: 2, kind: input, shape index: {}]
  %s3 = inlined_call_operand.vmem [shape: bf16[4,6], index: 3, kind: input, shape index: {}]
  %s4 = inlined_call_operand.vmem [shape: f32[4,4], index: 4, kind: input, shape index: {}]
  %s5 = inlined_call_operand.vmem [shape: bf16[4,4], index: 5, kind: input, shape index: {}]
  %s6 = inlined_call_operand.vmem [shape: f32[4,2], index: 6, kind: input, shape index: {}]
  %s7 = inlined_call_operand.vmem [shape: bf16[32,36], index: 7, kind: input, shape index: {}]
  %s8 = inlined_call_operand.vmem [shape: f32[8,2], index: 8, kind: input, shape index: {}]
  %s9 = inlined_call_operand.vmem [shape: f32[9,256], index: 9, kind: input, shape index: {}]
  %s10 = inlined_call_operand.vmem [shape: f32[2,32,256], index: 10, kind: output, shape index: {}]
  %s11 = sld [smem:[#allocation0]]
  $region73: #{product_upsampling_conv_block.1} parent=0
    _
  %s13 = ssub.s32 1, %s11
  %s14 = scalar_select 0, %s13, %s11
  loop: start=0, step=1, limit=4
  $region2: #{product_upsampling_conv_block.1} parent=0 // loop_pre_header
    _
  $region3: #{product_upsampling_conv_block.1} parent=0 // loop_header
    %s16 = sphi 0, %s20
    %p17 = scmp.ge.s32.totalorder %s16, 4
    %s26 = sphi 0, %s28
    %s29 = sphi 0, %s26
    %s30 = sphi 0, %s29
    %s46 = sphi 0, %s30
    %s52 = sphi 0, %s54
    %s55 = sphi 0, %s52
    %s56 = sphi 0, %s55
    %s72 = sphi 0, %s56
    %s76 = sphi 0, %s76
    %s78 = sphi 0, %s76
    %s79 = sphi 0, %s78
    %s93 = sphi 0, %s79
    %s97 = sphi 0, %s97
    %s99 = sphi 0, %s97
    %s100 = sphi 0, %s99
    %s114 = sphi 0, %s100
    %s118 = sphi 0, %s118
    %s120 = sphi 0, %s118
    %s121 = sphi 0, %s120
    %s135 = sphi 0, %s121
    %s139 = sphi 0, %s139
    %s141 = sphi 0, %s139
    %s142 = sphi 0, %s141
    %s156 = sphi 0, %s142
    %s160 = sphi 0, %s160
    %s162 = sphi 0, %s160
    %s163 = sphi 0, %s162
    %s177 = sphi 0, %s163
    %s181 = sphi 0, %s181
    %s183 = sphi 0, %s181
    %s184 = sphi 0, %s183
    %s198 = sphi 0, %s184
    %s202 = sphi 0, %s202
    %s204 = sphi 0, %s202
    %s205 = sphi 0, %s204
    %s219 = sphi 0, %s205
    %s223 = sphi 0, %s223
    %s225 = sphi 0, %s223
    %s226 = sphi 0, %s225
    %s240 = sphi 0, %s226
    %s246 = sphi 0, %s248
    %s249 = sphi 0, %s246
    %s250 = sphi 0, %s249
    %s266 = sphi 0, %s250
  $region4: #{product_upsampling_conv_block.1} parent=0 // loop_header_branch
    %19 = sbr.rel (%p17) target = $region8
  $region5: #{product_upsampling_conv_block.1} parent=0 // loop_body
    %s21 = ssub.s32 %s16, 1
    %s22 = ssub.s32 %s16, 2
    %s23 = sadd.s32 %s16, 1
    %s24 = ssub.s32 %s16, %s23
    %p25 = scmp.eq.s32.totalorder %s24, 0
    %s27 = sadd.s32 %s26, 1
    %s28 = scalar_select %p25, %s26, %s27
    %p31 = pneg %p25
    %p32 = scmp.eq.s32.totalorder %s16, 1
    %p33 = por %p31, %p32
    %p34 = scmp.ne.s32.totalorder %s26, %s29
    %p35 = scmp.eq.s32.totalorder %s16, 0
    %p36 = por %p34, %p35
    %p37 = scmp.ne.s32.totalorder %s26, %s29
    %p38 = scmp.eq.s32.totalorder %s21, 1
    %p39 = por %p37, %p38
    %p40 = scmp.ne.s32.totalorder %s29, %s30
    %p41 = scmp.eq.s32.totalorder %s21, 0
    %p42 = por %p40, %p41
    %p43 = scmp.ne.s32.totalorder %s29, %s30
    %p44 = scmp.eq.s32.totalorder %s22, 1
    %p45 = por %p43, %p44
    %p47 = scmp.ne.s32.totalorder %s30, %s46
    %p48 = scmp.eq.s32.totalorder %s22, 0
    %p49 = por %p47, %p48
    %s50 = ssub.s32 %s16, %s23
    %p51 = scmp.eq.s32.totalorder %s50, 0
    %s53 = sadd.s32 %s52, 1
    %s54 = scalar_select %p51, %s52, %s53
    %p57 = pneg %p51
    %p58 = scmp.eq.s32.totalorder %s16, 1
    %p59 = por %p57, %p58
    %p60 = scmp.ne.s32.totalorder %s52, %s55
    %p61 = scmp.eq.s32.totalorder %s16, 0
    %p62 = por %p60, %p61
    %p63 = scmp.ne.s32.totalorder %s52, %s55
    %p64 = scmp.eq.s32.totalorder %s21, 1
    %p65 = por %p63, %p64
    %p66 = scmp.ne.s32.totalorder %s55, %s56
    %p67 = scmp.eq.s32.totalorder %s21, 0
    %p68 = por %p66, %p67
    %p69 = scmp.ne.s32.totalorder %s55, %s56
    %p70 = scmp.eq.s32.totalorder %s22, 1
    %p71 = por %p69, %p70
    %p73 = scmp.ne.s32.totalorder %s56, %s72
    %p74 = scmp.eq.s32.totalorder %s22, 0
    %p75 = por %p73, %p74
    %s77 = sadd.s32 %s76, 1
    %p80 = scmp.eq.s32.totalorder %s16, 1
    %p81 = scmp.ne.s32.totalorder %s76, %s78
    %p82 = scmp.eq.s32.totalorder %s16, 0
    %p83 = por %p81, %p82
    %p84 = scmp.ne.s32.totalorder %s76, %s78
    %p85 = scmp.eq.s32.totalorder %s21, 1
    %p86 = por %p84, %p85
    %p87 = scmp.ne.s32.totalorder %s78, %s79
    %p88 = scmp.eq.s32.totalorder %s21, 0
    %p89 = por %p87, %p88
    %p90 = scmp.ne.s32.totalorder %s78, %s79
    %p91 = scmp.eq.s32.totalorder %s22, 1
    %p92 = por %p90, %p91
    %p94 = scmp.ne.s32.totalorder %s79, %s93
    %p95 = scmp.eq.s32.totalorder %s22, 0
    %p96 = por %p94, %p95
    %s98 = sadd.s32 %s97, 1
    %p101 = scmp.eq.s32.totalorder %s16, 1
    %p102 = scmp.ne.s32.totalorder %s97, %s99
    %p103 = scmp.eq.s32.totalorder %s16, 0
    %p104 = por %p102, %p103
    %p105 = scmp.ne.s32.totalorder %s97, %s99
    %p106 = scmp.eq.s32.totalorder %s21, 1
    %p107 = por %p105, %p106
    %p108 = scmp.ne.s32.totalorder %s99, %s100
    %p109 = scmp.eq.s32.totalorder %s21, 0
    %p110 = por %p108, %p109
    %p111 = scmp.ne.s32.totalorder %s99, %s100
    %p112 = scmp.eq.s32.totalorder %s22, 1
    %p113 = por %p111, %p112
    %p115 = scmp.ne.s32.totalorder %s100, %s114
    %p116 = scmp.eq.s32.totalorder %s22, 0
    %p117 = por %p115, %p116
    %s119 = sadd.s32 %s118, 1
    %p122 = scmp.eq.s32.totalorder %s16, 1
    %p123 = scmp.ne.s32.totalorder %s118, %s120
    %p124 = scmp.eq.s32.totalorder %s16, 0
    %p125 = por %p123, %p124
    %p126 = scmp.ne.s32.totalorder %s118, %s120
    %p127 = scmp.eq.s32.totalorder %s21, 1
    %p128 = por %p126, %p127
    %p129 = scmp.ne.s32.totalorder %s120, %s121
    %p130 = scmp.eq.s32.totalorder %s21, 0
    %p131 = por %p129, %p130
    %p132 = scmp.ne.s32.totalorder %s120, %s121
    %p133 = scmp.eq.s32.totalorder %s22, 1
    %p134 = por %p132, %p133
    %p136 = scmp.ne.s32.totalorder %s121, %s135
    %p137 = scmp.eq.s32.totalorder %s22, 0
    %p138 = por %p136, %p137
    %s140 = sadd.s32 %s139, 1
    %p143 = scmp.eq.s32.totalorder %s16, 1
    %p144 = scmp.ne.s32.totalorder %s139, %s141
    %p145 = scmp.eq.s32.totalorder %s16, 0
    %p146 = por %p144, %p145
    %p147 = scmp.ne.s32.totalorder %s139, %s141
    %p148 = scmp.eq.s32.totalorder %s21, 1
    %p149 = por %p147, %p148
    %p150 = scmp.ne.s32.totalorder %s141, %s142
    %p151 = scmp.eq.s32.totalorder %s21, 0
    %p152 = por %p150, %p151
    %p153 = scmp.ne.s32.totalorder %s141, %s142
    %p154 = scmp.eq.s32.totalorder %s22, 1
    %p155 = por %p153, %p154
    %p157 = scmp.ne.s32.totalorder %s142, %s156
    %p158 = scmp.eq.s32.totalorder %s22, 0
    %p159 = por %p157, %p158
    %s161 = sadd.s32 %s160, 1
    %p164 = scmp.eq.s32.totalorder %s16, 1
    %p165 = scmp.ne.s32.totalorder %s160, %s162
    %p166 = scmp.eq.s32.totalorder %s16, 0
    %p167 = por %p165, %p166
    %p168 = scmp.ne.s32.totalorder %s160, %s162
    %p169 = scmp.eq.s32.totalorder %s21, 1
    %p170 = por %p168, %p169
    %p171 = scmp.ne.s32.totalorder %s162, %s163
    %p172 = scmp.eq.s32.totalorder %s21, 0
    %p173 = por %p171, %p172
    %p174 = scmp.ne.s32.totalorder %s162, %s163
    %p175 = scmp.eq.s32.totalorder %s22, 1
    %p176 = por %p174, %p175
    %p178 = scmp.ne.s32.totalorder %s163, %s177
    %p179 = scmp.eq.s32.totalorder %s22, 0
    %p180 = por %p178, %p179
    %s182 = sadd.s32 %s181, 1
    %p185 = scmp.eq.s32.totalorder %s16, 1
    %p186 = scmp.ne.s32.totalorder %s181, %s183
    %p187 = scmp.eq.s32.totalorder %s16, 0
    %p188 = por %p186, %p187
    %p189 = scmp.ne.s32.totalorder %s181, %s183
    %p190 = scmp.eq.s32.totalorder %s21, 1
    %p191 = por %p189, %p190
    %p192 = scmp.ne.s32.totalorder %s183, %s184
    %p193 = scmp.eq.s32.totalorder %s21, 0
    %p194 = por %p192, %p193
    %p195 = scmp.ne.s32.totalorder %s183, %s184
    %p196 = scmp.eq.s32.totalorder %s22, 1
    %p197 = por %p195, %p196
    %p199 = scmp.ne.s32.totalorder %s184, %s198
    %p200 = scmp.eq.s32.totalorder %s22, 0
    %p201 = por %p199, %p200
    %s203 = sadd.s32 %s202, 1
    %p206 = scmp.eq.s32.totalorder %s16, 1
    %p207 = scmp.ne.s32.totalorder %s202, %s204
    %p208 = scmp.eq.s32.totalorder %s16, 0
    %p209 = por %p207, %p208
    %p210 = scmp.ne.s32.totalorder %s202, %s204
    %p211 = scmp.eq.s32.totalorder %s21, 1
    %p212 = por %p210, %p211
    %p213 = scmp.ne.s32.totalorder %s204, %s205
    %p214 = scmp.eq.s32.totalorder %s21, 0
    %p215 = por %p213, %p214
    %p216 = scmp.ne.s32.totalorder %s204, %s205
    %p217 = scmp.eq.s32.totalorder %s22, 1
    %p218 = por %p216, %p217
    %p220 = scmp.ne.s32.totalorder %s205, %s219
    %p221 = scmp.eq.s32.totalorder %s22, 0
    %p222 = por %p220, %p221
    %s224 = sadd.s32 %s223, 1
    %p227 = scmp.eq.s32.totalorder %s16, 1
    %p228 = scmp.ne.s32.totalorder %s223, %s225
    %p229 = scmp.eq.s32.totalorder %s16, 0
    %p230 = por %p228, %p229
    %p231 = scmp.ne.s32.totalorder %s223, %s225
    %p232 = scmp.eq.s32.totalorder %s21, 1
    %p233 = por %p231, %p232
    %p234 = scmp.ne.s32.totalorder %s225, %s226
    %p235 = scmp.eq.s32.totalorder %s21, 0
    %p236 = por %p234, %p235
    %p237 = scmp.ne.s32.totalorder %s225, %s226
    %p238 = scmp.eq.s32.totalorder %s22, 1
    %p239 = por %p237, %p238
    %p241 = scmp.ne.s32.totalorder %s226, %s240
    %p242 = scmp.eq.s32.totalorder %s22, 0
    %p243 = por %p241, %p242
    %s244 = ssub.s32 %s16, %s23
    %p245 = scmp.eq.s32.totalorder %s244, 0
    %s247 = sadd.s32 %s246, 1
    %s248 = scalar_select %p245, %s246, %s247
    %p251 = pneg %p245
    %p252 = scmp.eq.s32.totalorder %s16, 1
    %p253 = por %p251, %p252
    %p254 = scmp.ne.s32.totalorder %s246, %s249
    %p255 = scmp.eq.s32.totalorder %s16, 0
    %p256 = por %p254, %p255
    %p257 = scmp.ne.s32.totalorder %s246, %s249
    %p258 = scmp.eq.s32.totalorder %s21, 1
    %p259 = por %p257, %p258
    %p260 = scmp.ne.s32.totalorder %s249, %s250
    %p261 = scmp.eq.s32.totalorder %s21, 0
    %p262 = por %p260, %p261
    %p263 = scmp.ne.s32.totalorder %s249, %s250
    %p264 = scmp.eq.s32.totalorder %s22, 1
    %p265 = por %p263, %p264
    %p267 = scmp.ne.s32.totalorder %s250, %s266
    %p268 = scmp.eq.s32.totalorder %s22, 0
    %p269 = por %p267, %p268
    %p270 = scmp.le.s32.totalorder 1, %s16
    %p271 = scmp.lt.s32.totalorder %s16, 3
    %p272 = pnand %p270, %p271
    %p273 = pneg %p272
    // Predicated region
    $region9: #{product_upsampling_conv_block.1} parent=5 // pred_check
      _
    $region10: #{product_upsampling_conv_block.1} parent=5 // pred_check_branch
      %275 = sbr.rel (%p272) target = $region12
    $region11: #{product_upsampling_conv_block.1} parent=5 // pred_region
      %s276 = ssub.s32 %s16, 1
      // Predicated region
      $region13: #{product_upsampling_conv_block.1} parent=11 // pred_check
        %p277 = pneg %p89
      $region14: #{product_upsampling_conv_block.1} parent=11 // pred_check_branch
        %279 = sbr.rel (%p277) target = $region16
      $region15: #{product_upsampling_conv_block.1} parent=11 // pred_region
        _
      $region16: #{product_upsampling_conv_block.1} parent=11 // pred_fallthru
        _
      // Predicated region
      $region17: #{product_upsampling_conv_block.1} parent=11 // pred_check
        %p280 = pneg %p110
      $region18: #{product_upsampling_conv_block.1} parent=11 // pred_check_branch
        %282 = sbr.rel (%p280) target = $region20
      $region19: #{product_upsampling_conv_block.1} parent=11 // pred_region
        _
      $region20: #{product_upsampling_conv_block.1} parent=11 // pred_fallthru
        _
      // Predicated region
      $region21: #{product_upsampling_conv_block.1} parent=11 // pred_check
        %p283 = pneg %p131
      $region22: #{product_upsampling_conv_block.1} parent=11 // pred_check_branch
        %285 = sbr.rel (%p283) target = $region24
      $region23: #{product_upsampling_conv_block.1} parent=11 // pred_region
        _
      $region24: #{product_upsampling_conv_block.1} parent=11 // pred_fallthru
        _
      // Predicated region
      $region25: #{product_upsampling_conv_block.1} parent=11 // pred_check
        %p286 = pneg %p152
      $region26: #{product_upsampling_conv_block.1} parent=11 // pred_check_branch
        %288 = sbr.rel (%p286) target = $region28
      $region27: #{product_upsampling_conv_block.1} parent=11 // pred_region
        _
      $region28: #{product_upsampling_conv_block.1} parent=11 // pred_fallthru
        _
      // Predicated region
      $region29: #{product_upsampling_conv_block.1} parent=11 // pred_check
        %p289 = pneg %p173
      $region30: #{product_upsampling_conv_block.1} parent=11 // pred_check_branch
        %291 = sbr.rel (%p289) target = $region32
      $region31: #{product_upsampling_conv_block.1} parent=11 // pred_region
        _
      $region32: #{product_upsampling_conv_block.1} parent=11 // pred_fallthru
        _
      // Predicated region
      $region33: #{product_upsampling_conv_block.1} parent=11 // pred_check
        %p292 = pneg %p194
      $region34: #{product_upsampling_conv_block.1} parent=11 // pred_check_branch
        %294 = sbr.rel (%p292) target = $region36
      $region35: #{product_upsampling_conv_block.1} parent=11 // pred_region
        _
      $region36: #{product_upsampling_conv_block.1} parent=11 // pred_fallthru
        _
      // Predicated region
      $region37: #{product_upsampling_conv_block.1} parent=11 // pred_check
        %p295 = pneg %p215
      $region38: #{product_upsampling_conv_block.1} parent=11 // pred_check_branch
        %297 = sbr.rel (%p295) target = $region40
      $region39: #{product_upsampling_conv_block.1} parent=11 // pred_region
        _
      $region40: #{product_upsampling_conv_block.1} parent=11 // pred_fallthru
        _
      // Predicated region
      $region41: #{product_upsampling_conv_block.1} parent=11 // pred_check
        %p298 = pneg %p236
      $region42: #{product_upsampling_conv_block.1} parent=11 // pred_check_branch
        %300 = sbr.rel (%p298) target = $region44
      $region43: #{product_upsampling_conv_block.1} parent=11 // pred_region
        _
      $region44: #{product_upsampling_conv_block.1} parent=11 // pred_fallthru
        _
    $region12: #{product_upsampling_conv_block.1} parent=5 // pred_fallthru
      _
    %p301 = scmp.lt.s32.totalorder %s16, 2
    // Predicated region
    $region45: #{product_upsampling_conv_block.1} parent=5 // pred_check
      %p302 = pneg %p301
    $region46: #{product_upsampling_conv_block.1} parent=5 // pred_check_branch
      %304 = sbr.rel (%p302) target = $region48
    $region47: #{product_upsampling_conv_block.1} parent=5 // pred_region
      // Predicated region
      $region49: #{product_upsampling_conv_block.1} parent=47 // pred_check
        %p305 = pneg %p36
      $region50: #{product_upsampling_conv_block.1} parent=47 // pred_check_branch
        %307 = sbr.rel (%p305) target = $region52
      $region51: #{product_upsampling_conv_block.1} parent=47 // pred_region
        %p308 = scmp.lt.s32.totalorder %s16, 1
        %s309 = scalar_select %p308, %s16, 1
        %s310 = smul.addr %s309, 2
        %s311 = smul.addr %s310, 2
        %s312 = scalar_lea.vmem %s0, %s311
      $region52: #{product_upsampling_conv_block.1} parent=47 // pred_fallthru
        _
      // Predicated region
      $region53: #{product_upsampling_conv_block.1} parent=47 // pred_check
        %p313 = pneg %p62
      $region54: #{product_upsampling_conv_block.1} parent=47 // pred_check_branch
        %315 = sbr.rel (%p313) target = $region56
      $region55: #{product_upsampling_conv_block.1} parent=47 // pred_region
        %p316 = scmp.lt.s32.totalorder %s16, 1
        %s317 = scalar_select %p316, %s16, 1
        %s318 = smul.addr %s317, 2
        %s319 = smul.addr %s318, 4
        %s320 = scalar_lea.vmem %s1, %s319
      $region56: #{product_upsampling_conv_block.1} parent=47 // pred_fallthru
        _
    $region48: #{product_upsampling_conv_block.1} parent=5 // pred_fallthru
      _
    %p321 = scmp.le.s32.totalorder 1, %s16
    %p322 = scmp.lt.s32.totalorder %s16, 3
    %p323 = pnand %p321, %p322
    %p324 = pneg %p323
    // Predicated region
    $region57: #{product_upsampling_conv_block.1} parent=5 // pred_check
      _
    $region58: #{product_upsampling_conv_block.1} parent=5 // pred_check_branch
      %326 = sbr.rel (%p323) target = $region60
    $region59: #{product_upsampling_conv_block.1} parent=5 // pred_region
      %s327 = ssub.s32 %s16, 1
      %p328 = scmp.lt.s32.totalorder %s21, 1
      %s329 = scalar_select %p328, %s21, 1
      %s330 = smul.addr %s329, 2
      %s331 = smul.addr %s330, 2
      %s332 = scalar_lea.vmem %s0, %s331
      %p333 = pneg %p42
      %p334 = pneg %p39
      %p335 = scmp.lt.s32.totalorder %s21, 1
      %s336 = scalar_select %p335, %s21, 1
      %s337 = smul.addr %s336, 2
      %s338 = smul.addr %s337, 4
      %s339 = scalar_lea.vmem %s1, %s338
      %p340 = pneg %p68
      %p341 = pneg %p65
      %p342 = pneg %p89
      %p343 = pneg %p86
      %p344 = pneg %p110
      %p345 = pneg %p107
      %p346 = pneg %p131
      %p347 = pneg %p128
      %p348 = pneg %p152
      %p349 = pneg %p149
      %p350 = pneg %p173
      %p351 = pneg %p170
      %p352 = pneg %p194
      %p353 = pneg %p191
      %p354 = pneg %p215
      %p355 = pneg %p212
      %p356 = pneg %p236
      %p357 = pneg %p233
      %p358 = pneg %p262
      %p359 = pneg %p259
      %p360 = scmp.lt.s32.totalorder %s21, 1
      %s361 = scalar_select %p360, %s21, 1
      %s362 = smul.addr %s361, 8
      %s363 = smul.addr %s362, 8
      %s364 = scalar_lea.vmem %s10, %s363
      %p365 = scmp.lt.s32.totalorder %s21, 1
      %s366 = scalar_select %p365, %s21, 1
      %s367 = smul.addr %s366, 2
      %s368 = smul.addr %s367, 2
      %s369 = scalar_lea.vmem %s0, %s368
      %p370 = scmp.lt.s32.totalorder %s21, 1
      %s371 = scalar_select %p370, %s21, 1
      %s372 = smul.addr %s371, 2
      %s373 = smul.addr %s372, 4
      %s374 = scalar_lea.vmem %s1, %s373
      %p375 = scmp.lt.s32.totalorder %s21, 1
      %s376 = scalar_select %p375, %s21, 1
      %s377 = smul.addr %s376, 8
      %s378 = smul.addr %s377, 8
      %s379 = scalar_lea.vmem %s10, %s378
      %v381 = vld [vmem:[%s4] sm:$0xf]
      %v382 = vld [vmem:[%s2] sm:$0x3]
      %v383 = vld [vmem:[%s369] sm:$0xf]
      %385 = vst [vmem:[#allocation1] ss:$4 sm:$0xff] %v383
      %v386 = vld.sshfl [vmem:[#allocation1] sm:$0xff pattern:$0x73625140]
      %v387 = vld.sshfl [vmem:[#allocation1 + $0x8] sm:$0xff pattern:$0x73625140]
      %vm388 = vcmask 31744
      %v390 = vsel %vm388, %v382, 0
      %vm392 = vcmask 1041408
      %v393 = vsel %vm392, %v386, 0
      %v395 = vsel %vm392, %v387, 0
      %397 = vmatpush.bf16.msra.mxu0 0
      %398 = vmatpush.bf16.msra.mxu0 0
      %399 = vmatpush.bf16.msra.mxu0 0
      %400 = vmatpush.bf16.msra.mxu0 0
      %401 = vmatpush.bf16.msra.mxu0 0
      %402 = vmatpush.bf16.msra.mxu0 0
      %403 = vmatpush.bf16.msra.mxu0 0
      %404 = vmatpush.bf16.msra.mxu0 %v393
      %405 = vmatmul.bf16.gmra.mxu0 %v390
      %v406 = vpop.f32.mrf.mxu0
      %v407 = vadd.f32 0.0, %v406
      %v408 = vpop.f32.mrf.mxu0
      %409 = vdwg.mxu0
      %410 = vmatpush.bf16.msra.mxu0 0
      %411 = vmatpush.bf16.msra.mxu0 0
      %412 = vmatpush.bf16.msra.mxu0 0
      %413 = vmatpush.bf16.msra.mxu0 0
      %414 = vmatpush.bf16.msra.mxu0 0
      %415 = vmatpush.bf16.msra.mxu0 0
      %416 = vmatpush.bf16.msra.mxu0 0
      %417 = vmatpush.bf16.msra.mxu0 %v395
      %418 = vmatmul.bf16.gmra.mxu0 %v390
      %v419 = vpop.f32.mrf.mxu0
      %v420 = vadd.f32 0.0, %v419
      %v421 = vpop.f32.mrf.mxu0
      %422 = vdwg.mxu0
      %vm423 = vcmask 1043456
      %v424 = vsel %vm423, %v407, 0.0
      %v425 = vsel %vm423, %v420, 0.0
      %v426 = vadd.f32 %v424, %v425
      %427 = vadd.xlane.f32.xlu0 %v426
      %v428 = vpop.xlane.xlu0 %427
      %v429 = vrcp.pop 256.0
      %v430 = vmul.f32 256.0, %v429
      %v431 = vsub.f32 1.0, %v430
      %v432 = vmul.f32 %v429, %v431
      %v433 = vadd.f32 %v429, %v432
      %vm434 = vweird.f32 %v429
      %v435 = vsel %vm434, %v429, %v433
      %v436 = vmul.f32 %v428, %v435
      %v437 = vmul.f32 %v407, %v407
      %v438 = vmul.f32 %v420, %v420
      %v439 = vsel %vm423, %v437, 0.0
      %v440 = vsel %vm423, %v438, 0.0
      %v441 = vadd.f32 %v439, %v440
      %442 = vadd.xlane.f32.xlu0 %v441
      %v443 = vpop.xlane.xlu0 %442
      %v444 = vmul.f32 %v443, %v435
      %v445 = vmul.f32 %v436, %v436
      %v446 = vsub.f32 %v444, %v445
      %v447 = vmax.f32 %v446, 0.0
      %v448 = vsub.f32 %v407, %v436
      %v449 = vsub.f32 %v420, %v436
      %451 = vset.pattern.permute.xlu0 0
      %452 = vperm.xlu0 %451, %v381
      %v453 = vpop.permute.xlu0 %452
      %v455 = vmul.f32 %v453, %v448
      %v456 = vmul.f32 %v453, %v449
      %v457 = vadd.f32 %v447, 1e-05
      %v458 = vrsqrt.pop %v457
      %v459 = vmul.f32 %v458, %v457
      %v460 = vmul.f32 %v459, %v458
      %v461 = vmul.f32 0.5, %v460
      %v462 = vsub.f32 1.5, %v461
      %v463 = vmul.f32 %v458, %v462
      %vm464 = vweird.f32 %v457
      %vm465 = vweird.f32 %v458
      %vm466 = vmor %vm464, %vm465
      %v467 = vsel %vm466, %v458, %v463
      %v468 = vmul.f32 %v455, %v467
      %v469 = vmul.f32 %v456, %v467
      %470 = vset.pattern.permute.xlu0 1
      %471 = vperm.xlu0 %470, %v381
      %v472 = vpop.permute.xlu0 %471
      %v474 = vadd.f32 %v468, %v472
      %v475 = vadd.f32 %v469, %v472
      %vm476 = vcmp.gt.f32.partialorder %v474, 0.0
      %vm477 = vcmp.gt.f32.partialorder %v475, 0.0
      %v478 = vmul.f32 %v474, 0.01
      %v479 = vmul.f32 %v475, 0.01
      %v480 = vsel %vm476, %v474, %v478
      %v481 = vsel %vm477, %v475, %v479
      %v482 = vld [vmem:[%s3] sm:$0x3]
      %v483 = vld [vmem:[%s374] sm:$0x77]
      %v485 = vunpack.c.l.b16 %v483
      %v486 = vunpack.c.h.b16 %v483
      %v487 = vpack.c.b16 %v485, %v485
      %v488 = vpack.c.b16 %v486, %v486
      %vm489 = vcmask 48128
      %v491 = vsel %vm489, %v482, 0
      %vm493 = vcmask 1042432
      %v495 = vsel %vm493, %v487, 0
      %v498 = vsel %vm493, %v488, 0
      %500 = vmatpush.bf16.msra.mxu0 0
      %501 = vmatpush.bf16.msra.mxu0 0
      %502 = vmatpush.bf16.msra.mxu0 0
      %503 = vmatpush.bf16.msra.mxu0 0
      %504 = vmatpush.bf16.msra.mxu0 0
      %505 = vmatpush.bf16.msra.mxu0 0
      %506 = vmatpush.bf16.msra.mxu0 0
      %507 = vmatpush.bf16.msra.mxu0 %v495
      %508 = vmatmul.bf16.gmra.mxu0 %v491
      %v509 = vpop.f32.mrf.mxu0
      %v510 = vadd.f32 0.0, %v509
      %v511 = vpop.f32.mrf.mxu0
      %512 = vdwg.mxu0
      %513 = vmatpush.bf16.msra.mxu0 0
      %514 = vmatpush.bf16.msra.mxu0 0
      %515 = vmatpush.bf16.msra.mxu0 0
      %516 = vmatpush.bf16.msra.mxu0 0
      %517 = vmatpush.bf16.msra.mxu0 0
      %518 = vmatpush.bf16.msra.mxu0 0
      %519 = vmatpush.bf16.msra.mxu0 0
      %520 = vmatpush.bf16.msra.mxu0 %v498
      %521 = vmatmul.bf16.gmra.mxu0 %v491
      %v522 = vpop.f32.mrf.mxu0
      %v523 = vadd.f32 0.0, %v522
      %v524 = vpop.f32.mrf.mxu0
      %525 = vdwg.mxu0
      %v526 = vsel %vm423, %v510, 0.0
      %v527 = vsel %vm423, %v523, 0.0
      %v528 = vadd.f32 %v526, %v527
      %529 = vadd.xlane.f32.xlu0 %v528
      %v530 = vpop.xlane.xlu0 %529
      %v531 = vmul.f32 %v530, %v435
      %v532 = vmul.f32 %v510, %v510
      %v533 = vmul.f32 %v523, %v523
      %v534 = vsel %vm423, %v532, 0.0
      %v535 = vsel %vm423, %v533, 0.0
      %v536 = vadd.f32 %v534, %v535
      %537 = vadd.xlane.f32.xlu0 %v536
      %v538 = vpop.xlane.xlu0 %537
      %v539 = vmul.f32 %v538, %v435
      %v540 = vmul.f32 %v531, %v531
      %v541 = vsub.f32 %v539, %v540
      %v542 = vmax.f32 %v541, 0.0
      %v543 = vsub.f32 %v510, %v531
      %v544 = vsub.f32 %v523, %v531
      %545 = vset.pattern.permute.xlu0 2
      %546 = vperm.xlu0 %545, %v381
      %v547 = vpop.permute.xlu0 %546
      %v549 = vmul.f32 %v547, %v543
      %v550 = vmul.f32 %v547, %v544
      %v551 = vadd.f32 %v542, 1e-05
      %v552 = vrsqrt.pop %v551
      %v553 = vmul.f32 %v552, %v551
      %v554 = vmul.f32 %v553, %v552
      %v555 = vmul.f32 0.5, %v554
      %v556 = vsub.f32 1.5, %v555
      %v557 = vmul.f32 %v552, %v556
      %vm558 = vweird.f32 %v551
      %vm559 = vweird.f32 %v552
      %vm560 = vmor %vm558, %vm559
      %v561 = vsel %vm560, %v552, %v557
      %v562 = vmul.f32 %v549, %v561
      %v563 = vmul.f32 %v550, %v561
      %564 = vset.pattern.permute.xlu0 3
      %565 = vperm.xlu0 %564, %v381
      %v566 = vpop.permute.xlu0 %565
      %v568 = vadd.f32 %v562, %v566
      %v569 = vadd.f32 %v563, %v566
      %vm570 = vcmp.gt.f32.partialorder %v568, 0.0
      %vm571 = vcmp.gt.f32.partialorder %v569, 0.0
      %v572 = vmul.f32 %v568, 0.01
      %v573 = vmul.f32 %v569, 0.01
      %v574 = vsel %vm570, %v568, %v572
      %v575 = vsel %vm571, %v569, %v573
      %v576 = vadd.f32 %v480, %v574
      %v577 = vadd.f32 %v481, %v575
      %v578 = vsub.f32 0.0, %v576
      %v579 = vsub.f32 0.0, %v577
      %v580 = vrcp.pop 8.0
      %v581 = vmul.f32 8.0, %v580
      %v582 = vsub.f32 1.0, %v581
      %v583 = vmul.f32 %v580, %v582
      %v584 = vadd.f32 %v580, %v583
      %vm585 = vweird.f32 %v580
      %v586 = vsel %vm585, %v580, %v584
      %v587 = vmul.f32 %v578, %v586
      %v588 = vmul.f32 %v579, %v586
      %v589 = vmul.f32 %v587, 1.442695
      %v590 = vpow.pop %v589
      %v591 = vmul.f32 %v588, 1.442695
      %v592 = vpow.pop %v591
      %v593 = vld [vmem:[%s6] sm:$0xf]
      %v594 = vld [vmem:[%s5] sm:$0x3]
      %v595 = vpack.c.bf16 %v590, %v590
      %v596 = vpack.c.bf16 %v592, %v592
      %v598 = vsel %vm388, %v594, 0
      %v601 = vsel %vm392, %v595, 0
      %v604 = vsel %vm392, %v596, 0
      %606 = vmatpush.bf16.msra.mxu0 0
      %607 = vmatpush.bf16.msra.mxu0 0
      %608 = vmatpush.bf16.msra.mxu0 0
      %609 = vmatpush.bf16.msra.mxu0 0
      %610 = vmatpush.bf16.msra.mxu0 0
      %611 = vmatpush.bf16.msra.mxu0 0
      %612 = vmatpush.bf16.msra.mxu0 0
      %613 = vmatpush.bf16.msra.mxu0 %v601
      %614 = vmatmul.bf16.gmra.mxu0 %v598
      %v615 = vpop.f32.mrf.mxu0
      %v616 = vadd.f32 0.0, %v615
      %v617 = vpop.f32.mrf.mxu0
      %618 = vdwg.mxu0
      %619 = vmatpush.bf16.msra.mxu0 0
      %620 = vmatpush.bf16.msra.mxu0 0
      %621 = vmatpush.bf16.msra.mxu0 0
      %622 = vmatpush.bf16.msra.mxu0 0
      %623 = vmatpush.bf16.msra.mxu0 0
      %624 = vmatpush.bf16.msra.mxu0 0
      %625 = vmatpush.bf16.msra.mxu0 0
      %626 = vmatpush.bf16.msra.mxu0 %v604
      %627 = vmatmul.bf16.gmra.mxu0 %v598
      %v628 = vpop.f32.mrf.mxu0
      %v629 = vadd.f32 0.0, %v628
      %v630 = vpop.f32.mrf.mxu0
      %631 = vdwg.mxu0
      %v632 = vsel %vm423, %v616, 0.0
      %v633 = vsel %vm423, %v629, 0.0
      %v634 = vadd.f32 %v632, %v633
      %635 = vadd.xlane.f32.xlu0 %v634
      %v636 = vpop.xlane.xlu0 %635
      %v637 = vmul.f32 %v636, %v435
      %v638 = vmul.f32 %v616, %v616
      %v639 = vmul.f32 %v629, %v629
      %v640 = vsel %vm423, %v638, 0.0
      %v641 = vsel %vm423, %v639, 0.0
      %v642 = vadd.f32 %v640, %v641
      %643 = vadd.xlane.f32.xlu0 %v642
      %v644 = vpop.xlane.xlu0 %643
      %v645 = vmul.f32 %v644, %v435
      %v646 = vmul.f32 %v637, %v637
      %v647 = vsub.f32 %v645, %v646
      %v648 = vmax.f32 %v647, 0.0
      %v649 = vsub.f32 %v616, %v637
      %v650 = vsub.f32 %v629, %v637
      %652 = vset.pattern.permute.xlu0 0
      %653 = vperm.xlu0 %652, %v593
      %v654 = vpop.permute.xlu0 %653
      %v656 = vmul.f32 %v654, %v649
      %v657 = vmul.f32 %v654, %v650
      %v658 = vadd.f32 %v648, 1e-05
      %v659 = vrsqrt.pop %v658
      %v660 = vmul.f32 %v659, %v658
      %v661 = vmul.f32 %v660, %v659
      %v662 = vmul.f32 0.5, %v661
      %v663 = vsub.f32 1.5, %v662
      %v664 = vmul.f32 %v659, %v663
      %vm665 = vweird.f32 %v658
      %vm666 = vweird.f32 %v659
      %vm667 = vmor %vm665, %vm666
      %v668 = vsel %vm667, %v659, %v664
      %v669 = vmul.f32 %v656, %v668
      %v670 = vmul.f32 %v657, %v668
      %671 = vset.pattern.permute.xlu0 1
      %672 = vperm.xlu0 %671, %v593
      %v673 = vpop.permute.xlu0 %672
      %v675 = vadd.f32 %v669, %v673
      %v676 = vadd.f32 %v670, %v673
      %vm677 = vcmp.gt.f32.partialorder %v675, 0.0
      %vm678 = vcmp.gt.f32.partialorder %v676, 0.0
      %v679 = vmin.f32 %v675, 0.0
      %v680 = vmin.f32 %v676, 0.0
      %v681 = vmul.f32 %v679, 1.442695
      %v682 = vpow.pop %v681
      %v683 = vmul.f32 %v680, 1.442695
      %v684 = vpow.pop %v683
      %v685 = vsub.f32 %v682, 1.0
      %v686 = vsub.f32 %v684, 1.0
      %v687 = vsel %vm677, %v675, %v685
      %v688 = vsel %vm678, %v676, %v686
      %v689 = vld [vmem:[%s9] sm:$0xff]
      %v690 = vld [vmem:[%s9 + $0x8] sm:$0xff]
      %v691 = vld [vmem:[%s9 + $0x10] sm:$0x1]
      %v692 = vld [vmem:[%s9 + $0x18] sm:$0x1]
      %693 = vrot.lane.b32.xlu0 %v687, 17
      %v694 = vpop.permute.xlu0 %693
      %695 = vrot.lane.b32.xlu0 %v688, 17
      %v696 = vpop.permute.xlu0 %695
      %v697 = vlaneseq
      %v698 = vand.u32 %v697, 127
      %vm699 = vcmp.lt.s32.totalorder %v698, 17
      %v700 = vsel %vm699, %v694, %v696
      %v701 = vsel %vm699, %v696, %v694
      %v702 = vperm.slane %v689, 0
      %v703 = vperm.slane %v690, 0
      %v704 = vmul.f32 %v701, %v702
      %v705 = vmul.f32 %v700, %v703
      %v706 = vpack.c.bf16 %v705, %v704
      %707 = vrot.lane.b32.xlu0 %v687, 16
      %v708 = vpop.permute.xlu0 %707
      %709 = vrot.lane.b32.xlu0 %v688, 16
      %v710 = vpop.permute.xlu0 %709
      %vm711 = vcmp.lt.s32.totalorder %v698, 16
      %v712 = vsel %vm711, %v708, %v710
      %v713 = vsel %vm711, %v710, %v708
      %v714 = vperm.slane %v689, 1
      %v715 = vperm.slane %v690, 1
      %v716 = vmul.f32 %v713, %v714
      %v717 = vmul.f32 %v712, %v715
      %v718 = vpack.c.bf16 %v717, %v716
      %719 = vrot.lane.b32.xlu0 %v687, 15
      %v720 = vpop.permute.xlu0 %719
      %721 = vrot.lane.b32.xlu0 %v688, 15
      %v722 = vpop.permute.xlu0 %721
      %vm723 = vcmp.lt.s32.totalorder %v698, 15
      %v724 = vsel %vm723, %v720, %v722
      %v725 = vsel %vm723, %v722, %v720
      %v726 = vperm.slane %v689, 2
      %v727 = vperm.slane %v690, 2
      %v728 = vmul.f32 %v725, %v726
      %v729 = vmul.f32 %v724, %v727
      %v730 = vpack.c.bf16 %v729, %v728
      %731 = vrot.lane.b32.xlu0 %v687, 1
      %v732 = vpop.permute.xlu0 %731
      %733 = vrot.lane.b32.xlu0 %v688, 1
      %v734 = vpop.permute.xlu0 %733
      %vm735 = vcmp.lt.s32.totalorder %v698, 1
      %v736 = vsel %vm735, %v732, %v734
      %v737 = vsel %vm735, %v734, %v732
      %v738 = vperm.slane %v689, 3
      %v739 = vperm.slane %v690, 3
      %v740 = vmul.f32 %v737, %v738
      %v741 = vmul.f32 %v736, %v739
      %v742 = vpack.c.bf16 %v741, %v740
      %v743 = vpack.c.bf16 %v688, %v687
      %744 = vrot.lane.b32.xlu0 %v687, 127
      %v745 = vpop.permute.xlu0 %744
      %746 = vrot.lane.b32.xlu0 %v688, 127
      %v747 = vpop.permute.xlu0 %746
      %vm748 = vcmp.lt.s32.totalorder %v698, 127
      %v749 = vsel %vm748, %v745, %v747
      %v750 = vsel %vm748, %v747, %v745
      %v751 = vperm.slane %v689, 5
      %v752 = vperm.slane %v690, 5
      %v753 = vmul.f32 %v749, %v751
      %v754 = vmul.f32 %v750, %v752
      %v755 = vpack.c.bf16 %v754, %v753
      %756 = vrot.lane.b32.xlu0 %v687, 113
      %v757 = vpop.permute.xlu0 %756
      %758 = vrot.lane.b32.xlu0 %v688, 113
      %v759 = vpop.permute.xlu0 %758
      %vm760 = vcmp.lt.s32.totalorder %v698, 113
      %v761 = vsel %vm760, %v757, %v759
      %v762 = vsel %vm760, %v759, %v757
      %v763 = vperm.slane %v689, 6
      %v764 = vperm.slane %v690, 6
      %v765 = vmul.f32 %v761, %v763
      %v766 = vmul.f32 %v762, %v764
      %v767 = vpack.c.bf16 %v766, %v765
      %768 = vrot.lane.b32.xlu0 %v687, 112
      %v769 = vpop.permute.xlu0 %768
      %770 = vrot.lane.b32.xlu0 %v688, 112
      %v771 = vpop.permute.xlu0 %770
      %vm772 = vcmp.lt.s32.totalorder %v698, 112
      %v773 = vsel %vm772, %v769, %v771
      %v774 = vsel %vm772, %v771, %v769
      %v775 = vperm.slane %v689, 7
      %v776 = vperm.slane %v690, 7
      %v777 = vmul.f32 %v773, %v775
      %v778 = vmul.f32 %v774, %v776
      %v779 = vpack.c.bf16 %v778, %v777
      %780 = vrot.lane.b32.xlu0 %v687, 111
      %v781 = vpop.permute.xlu0 %780
      %782 = vrot.lane.b32.xlu0 %v688, 111
      %v783 = vpop.permute.xlu0 %782
      %vm784 = vcmp.lt.s32.totalorder %v698, 111
      %v785 = vsel %vm784, %v781, %v783
      %v786 = vsel %vm784, %v783, %v781
      %v787 = vperm.slane %v691, 0
      %v788 = vperm.slane %v692, 0
      %v789 = vmul.f32 %v785, %v787
      %v790 = vmul.f32 %v786, %v788
      %v791 = vpack.c.bf16 %v790, %v789
      %v793 = vunpack.c.l.b16 %v706
      %v794 = vunpack.c.h.b16 %v706
      %v795 = vpack.c.b16 %v793, %v793
      %v796 = vpack.c.b16 %v794, %v794
      %v798 = vunpack.c.l.b16 %v718
      %v799 = vunpack.c.h.b16 %v718
      %v800 = vpack.c.b16 %v798, %v798
      %v801 = vpack.c.b16 %v799, %v799
      %v802 = vrot.slane %v800, 6
      %v803 = vrot.slane %v801, 6
      %v805 = vunpack.c.l.b16 %v730
      %v806 = vunpack.c.h.b16 %v730
      %v807 = vpack.c.b16 %v805, %v805
      %v808 = vpack.c.b16 %v806, %v806
      %v810 = vunpack.c.l.b16 %v742
      %v811 = vunpack.c.h.b16 %v742
      %v812 = vpack.c.b16 %v810, %v810
      %v813 = vpack.c.b16 %v811, %v811
      %v814 = vrot.slane %v812, 2
      %v815 = vrot.slane %v813, 2
      %v817 = vunpack.c.l.b16 %v743
      %v818 = vunpack.c.h.b16 %v743
      %v819 = vpack.c.b16 %v817, %v817
      %v820 = vpack.c.b16 %v818, %v818
      %v822 = vunpack.c.l.b16 %v755
      %v823 = vunpack.c.h.b16 %v755
      %v824 = vpack.c.b16 %v822, %v822
      %v825 = vpack.c.b16 %v823, %v823
      %v826 = vrot.slane %v824, 6
      %v827 = vrot.slane %v825, 6
      %v829 = vunpack.c.l.b16 %v767
      %v830 = vunpack.c.h.b16 %v767
      %v831 = vpack.c.b16 %v829, %v829
      %v832 = vpack.c.b16 %v830, %v830
      %v834 = vunpack.c.l.b16 %v779
      %v835 = vunpack.c.h.b16 %v779
      %v836 = vpack.c.b16 %v834, %v834
      %v837 = vpack.c.b16 %v835, %v835
      %v838 = vrot.slane %v836, 2
      %v839 = vrot.slane %v837, 2
      %v841 = vunpack.c.l.b16 %v791
      %v842 = vunpack.c.h.b16 %v791
      %v843 = vpack.c.b16 %v841, %v841
      %v844 = vpack.c.b16 %v842, %v842
      %v847 = vsel %vm392, %v795, %v802
      %v850 = vsel %vm392, %v796, %v803
      %v852 = vsel %vm423, %v847, %v807
      %v854 = vsel %vm423, %v850, %v808
      %vm855 = vcmask 1045504
      %v857 = vsel %vm855, %v852, %v814
      %v860 = vsel %vm855, %v854, %v815
      %v864 = vsel %vm392, %v819, %v826
      %v867 = vsel %vm392, %v820, %v827
      %v869 = vsel %vm423, %v864, %v831
      %v871 = vsel %vm423, %v867, %v832
      %v873 = vsel %vm855, %v869, %v838
      %v876 = vsel %vm855, %v871, %v839
      %v878 = vld [vmem:[%s7] sm:$0xf]
      %v879 = vld [vmem:[%s7 + $0x4] sm:$0xf]
      %v880 = vld [vmem:[%s7 + $0x8] sm:$0xf]
      %v881 = vld [vmem:[%s7 + $0xc] sm:$0xf]
      %v886 = vunpack.c.l.b16 %v878
      %v887 = vunpack.c.l.b16 %v879
      %v888 = vunpack.c.l.b16 %v880
      %v889 = vunpack.c.l.b16 %v881
      %v890 = vpack.c.b16 %v887, %v886
      %v891 = vpack.c.b16 %v889, %v888
      %vm892 = vcmask 293888
      %v894 = vsel %vm892, %v890, 0
      %v897 = vsel %vm892, %v891, 0
      %v900 = vsel %vm392, %v843, 0
      %v903 = vsel %vm392, %v844, 0
      %905 = vmatpush.bf16.msra.mxu0 0
      %906 = vmatpush.bf16.msra.mxu0 0
      %907 = vmatpush.bf16.msra.mxu0 0
      %908 = vmatpush.bf16.msra.mxu0 0
      %909 = vmatpush.bf16.msra.mxu0 0
      %910 = vmatpush.bf16.msra.mxu0 %v900
      %911 = vmatpush.bf16.msra.mxu0 %v873
      %912 = vmatpush.bf16.msra.mxu0 %v857
      %913 = vmatmul.bf16.gmra.mxu0 %v894
      %v914 = vpop.f32.mrf.mxu0
      %v915 = vadd.f32 0.0, %v914
      %v916 = vpop.f32.mrf.mxu0
      %v917 = vadd.f32 0.0, %v916
      %918 = vmatmul.bf16.gmra.mxu0 %v897
      %v919 = vpop.f32.mrf.mxu0
      %v920 = vadd.f32 0.0, %v919
      %v921 = vpop.f32.mrf.mxu0
      %v922 = vadd.f32 0.0, %v921
      %923 = vdwg.mxu0
      %924 = vmatpush.bf16.msra.mxu0 0
      %925 = vmatpush.bf16.msra.mxu0 0
      %926 = vmatpush.bf16.msra.mxu0 0
      %927 = vmatpush.bf16.msra.mxu0 0
      %928 = vmatpush.bf16.msra.mxu0 0
      %929 = vmatpush.bf16.msra.mxu0 %v903
      %930 = vmatpush.bf16.msra.mxu0 %v876
      %931 = vmatpush.bf16.msra.mxu0 %v860
      %932 = vmatmul.bf16.gmra.mxu0 %v894
      %v933 = vpop.f32.mrf.mxu0
      %v934 = vadd.f32 0.0, %v933
      %v935 = vpop.f32.mrf.mxu0
      %v936 = vadd.f32 0.0, %v935
      %937 = vmatmul.bf16.gmra.mxu0 %v897
      %v938 = vpop.f32.mrf.mxu0
      %v939 = vadd.f32 0.0, %v938
      %v940 = vpop.f32.mrf.mxu0
      %v941 = vadd.f32 0.0, %v940
      %942 = vdwg.mxu0
      %v943 = vadd.f32 %v915, %v934
      %944 = vadd.xlane.f32.xlu0 %v943
      %v945 = vpop.xlane.xlu0 %944
      %v946 = vadd.f32 %v917, %v936
      %947 = vadd.xlane.f32.xlu0 %v946
      %v948 = vpop.xlane.xlu0 %947
      %v949 = vadd.f32 %v920, %v939
      %950 = vadd.xlane.f32.xlu0 %v949
      %v951 = vpop.xlane.xlu0 %950
      %v952 = vadd.f32 %v922, %v941
      %953 = vadd.xlane.f32.xlu0 %v952
      %v954 = vpop.xlane.xlu0 %953
      %v955 = vadd.f32 %v945, %v948
      %v956 = vadd.f32 %v955, %v951
      %v957 = vadd.f32 %v956, %v954
      %v958 = vmul.f32 %v957, 0.0009765625
      %v959 = vmul.f32 %v915, %v915
      %v960 = vmul.f32 %v934, %v934
      %v961 = vmul.f32 %v917, %v917
      %v962 = vmul.f32 %v936, %v936
      %v963 = vmul.f32 %v920, %v920
      %v964 = vmul.f32 %v939, %v939
      %v965 = vmul.f32 %v922, %v922
      %v966 = vmul.f32 %v941, %v941
      %v967 = vadd.f32 %v959, %v960
      %968 = vadd.xlane.f32.xlu0 %v967
      %v969 = vpop.xlane.xlu0 %968
      %v970 = vadd.f32 %v961, %v962
      %971 = vadd.xlane.f32.xlu0 %v970
      %v972 = vpop.xlane.xlu0 %971
      %v973 = vadd.f32 %v963, %v964
      %974 = vadd.xlane.f32.xlu0 %v973
      %v975 = vpop.xlane.xlu0 %974
      %v976 = vadd.f32 %v965, %v966
      %977 = vadd.xlane.f32.xlu0 %v976
      %v978 = vpop.xlane.xlu0 %977
      %v979 = vadd.f32 %v969, %v972
      %v980 = vadd.f32 %v979, %v975
      %v981 = vadd.f32 %v980, %v978
      %v982 = vmul.f32 %v981, 0.0009765625
      %v983 = vmul.f32 %v958, %v958
      %v984 = vsub.f32 %v982, %v983
      %v985 = vmax.f32 %v984, 0.0
      %v986 = vadd.f32 %v985, 1e-05
      %v987 = vrsqrt.pop %v986
      %v988 = vmul.f32 %v987, %v986
      %v989 = vmul.f32 %v988, %v987
      %v990 = vmul.f32 0.5, %v989
      %v991 = vsub.f32 1.5, %v990
      %v992 = vmul.f32 %v987, %v991
      %vm993 = vweird.f32 %v986
      %vm994 = vweird.f32 %v987
      %vm995 = vmor %vm993, %vm994
      %v996 = vsel %vm995, %v987, %v992
      %v997 = vld [vmem:[%s8] sm:$0xff]
      %v998 = vmul.f32 %v997, %v996
      %v999 = vmul.f32 %v998, %v958
      %1001 = vrot.lane.b32.xlu0 %v999, 1
      %v1002 = vpop.permute.xlu0 %1001
      %v1004 = vsub.f32 %v997, %v1002
      %1006 = vset.pattern.permute.xlu0 0
      %1007 = vperm.xlu0 %1006, %v998
      %v1008 = vpop.permute.xlu0 %1007
      %v1010 = vmul.f32 %v1008, %v915
      %v1011 = vmul.f32 %v1008, %v934
      %v1012 = vmul.f32 %v1008, %v917
      %v1013 = vmul.f32 %v1008, %v936
      %v1014 = vmul.f32 %v1008, %v920
      %v1015 = vmul.f32 %v1008, %v939
      %v1016 = vmul.f32 %v1008, %v922
      %v1017 = vmul.f32 %v1008, %v941
      %1019 = vset.pattern.permute.xlu0 1
      %1020 = vperm.xlu0 %1019, %v1004
      %v1021 = vpop.permute.xlu0 %1020
      %v1023 = vadd.f32 %v1010, %v1021
      %v1024 = vadd.f32 %v1011, %v1021
      %v1025 = vadd.f32 %v1012, %v1021
      %v1026 = vadd.f32 %v1013, %v1021
      %v1027 = vadd.f32 %v1014, %v1021
      %v1028 = vadd.f32 %v1015, %v1021
      %v1029 = vadd.f32 %v1016, %v1021
      %v1030 = vadd.f32 %v1017, %v1021
      %vm1031 = vcmp.gt.f32.partialorder %v1023, 0.0
      %vm1032 = vcmp.gt.f32.partialorder %v1024, 0.0
      %vm1033 = vcmp.gt.f32.partialorder %v1025, 0.0
      %vm1034 = vcmp.gt.f32.partialorder %v1026, 0.0
      %vm1035 = vcmp.gt.f32.partialorder %v1027, 0.0
      %vm1036 = vcmp.gt.f32.partialorder %v1028, 0.0
      %vm1037 = vcmp.gt.f32.partialorder %v1029, 0.0
      %vm1038 = vcmp.gt.f32.partialorder %v1030, 0.0
      %v1039 = vmin.f32 %v1023, 0.0
      %v1040 = vmin.f32 %v1024, 0.0
      %v1041 = vmin.f32 %v1025, 0.0
      %v1042 = vmin.f32 %v1026, 0.0
      %v1043 = vmin.f32 %v1027, 0.0
      %v1044 = vmin.f32 %v1028, 0.0
      %v1045 = vmin.f32 %v1029, 0.0
      %v1046 = vmin.f32 %v1030, 0.0
      %v1047 = vmul.f32 %v1039, 1.442695
      %v1048 = vpow.pop %v1047
      %v1049 = vmul.f32 %v1040, 1.442695
      %v1050 = vpow.pop %v1049
      %v1051 = vmul.f32 %v1041, 1.442695
      %v1052 = vpow.pop %v1051
      %v1053 = vmul.f32 %v1042, 1.442695
      %v1054 = vpow.pop %v1053
      %v1055 = vmul.f32 %v1043, 1.442695
      %v1056 = vpow.pop %v1055
      %v1057 = vmul.f32 %v1044, 1.442695
      %v1058 = vpow.pop %v1057
      %v1059 = vmul.f32 %v1045, 1.442695
      %v1060 = vpow.pop %v1059
      %v1061 = vmul.f32 %v1046, 1.442695
      %v1062 = vpow.pop %v1061
      %v1063 = vsub.f32 %v1048, 1.0
      %v1064 = vsub.f32 %v1050, 1.0
      %v1065 = vsub.f32 %v1052, 1.0
      %v1066 = vsub.f32 %v1054, 1.0
      %v1067 = vsub.f32 %v1056, 1.0
      %v1068 = vsub.f32 %v1058, 1.0
      %v1069 = vsub.f32 %v1060, 1.0
      %v1070 = vsub.f32 %v1062, 1.0
      %v1071 = vsel %vm1031, %v1023, %v1063
      %v1072 = vsel %vm1032, %v1024, %v1064
      %v1073 = vsel %vm1033, %v1025, %v1065
      %v1074 = vsel %vm1034, %v1026, %v1066
      %v1075 = vsel %vm1035, %v1027, %v1067
      %v1076 = vsel %vm1036, %v1028, %v1068
      %v1077 = vsel %vm1037, %v1029, %v1069
      %v1078 = vsel %vm1038, %v1030, %v1070
      %1079 = vst [vmem:[%s379] sm:$0xff] %v1071
      %1080 = vst [vmem:[%s379 + $0x8] sm:$0xff] %v1072
      %1081 = vst [vmem:[%s379 + $0x10] sm:$0xff] %v1073
      %1082 = vst [vmem:[%s379 + $0x18] sm:$0xff] %v1074
      %1083 = vst [vmem:[%s379 + $0x20] sm:$0xff] %v1075
      %1084 = vst [vmem:[%s379 + $0x28] sm:$0xff] %v1076
      %1085 = vst [vmem:[%s379 + $0x30] sm:$0xff] %v1077
      %1086 = vst [vmem:[%s379 + $0x38] sm:$0xff] %v1078
      %p1087 = scmp.lt.s32.totalorder %s21, 1
      %s1088 = scalar_select %p1087, %s21, 1
      %s1089 = smul.addr %s1088, 8
      %s1090 = smul.addr %s1089, 8
      %s1091 = scalar_lea.vmem %s10, %s1090
      // Predicated region
      $region61: #{product_upsampling_conv_block.1} parent=59 // pred_check
        %p1092 = pneg %p259
      $region62: #{product_upsampling_conv_block.1} parent=59 // pred_check_branch
        %1094 = sbr.rel (%p1092) target = $region64
      $region63: #{product_upsampling_conv_block.1} parent=59 // pred_region
        _
      $region64: #{product_upsampling_conv_block.1} parent=59 // pred_fallthru
        _
    $region60: #{product_upsampling_conv_block.1} parent=5 // pred_fallthru
      _
    %p1095 = scmp.le.s32.totalorder 2, %s16
    // Predicated region
    $region65: #{product_upsampling_conv_block.1} parent=5 // pred_check
      %p1096 = pneg %p1095
    $region66: #{product_upsampling_conv_block.1} parent=5 // pred_check_branch
      %1098 = sbr.rel (%p1096) target = $region68
    $region67: #{product_upsampling_conv_block.1} parent=5 // pred_region
      %s1099 = ssub.s32 %s16, 2
      // Predicated region
      $region69: #{product_upsampling_conv_block.1} parent=67 // pred_check
        %p1100 = pneg %p265
      $region70: #{product_upsampling_conv_block.1} parent=67 // pred_check_branch
        %1102 = sbr.rel (%p1100) target = $region72
      $region71: #{product_upsampling_conv_block.1} parent=67 // pred_region
        %p1103 = scmp.lt.s32.totalorder %s22, 1
        %s1104 = scalar_select %p1103, %s22, 1
        %s1105 = smul.addr %s1104, 8
        %s1106 = smul.addr %s1105, 8
        %s1107 = scalar_lea.vmem %s10, %s1106
      $region72: #{product_upsampling_conv_block.1} parent=67 // pred_fallthru
        _
    $region68: #{product_upsampling_conv_block.1} parent=5 // pred_fallthru
      _
  $region6: #{product_upsampling_conv_block.1} parent=0 // loop_footer
    %s20 = sadd.s32 1, %s16
  $region7: #{product_upsampling_conv_block.1} parent=0 // loop_footer_branch
    %15 = sbr.rel target = $region3
  $region8: #{product_upsampling_conv_block.1} parent=0 // loop_exit
    _

</llo_original>
